<compile_context>
chip_gen: v5e
topology: v5e:2x2
jax: 0.10.0
libtpu: 0.0.40
codegen_flags: <defaults>
</compile_context>

<pallas_src>
import functools

import jax
import jax.numpy as jnp
from jax.experimental import pallas as pl
from jax.experimental.pallas import tpu as pltpu


def _fused_lstm_kernel(*refs, seq, batch, hidden, num_layers):
    """Fused multi-layer LSTM; whole time loop in one kernel invocation.

    refs layout (rows flattened time-major as t*B + b):
      gx0_ref : (S*B, 4H)  layer-0 input projection incl. bias (f32 or bf16)
      w0hh_ref: (H, 4H)    layer-0 W_hh^T (matmul dtype)
      per layer l = 1..L-1:
        wih_ref (H, 4H), whh_ref (H, 4H)  [matmul dtype], b_ref (1, 4H) [f32]
      out_ref : (B, L*H)   final cell states per layer, concatenated
      hs_ref  : (S*B, H)   scratch f32: hidden sequence handed to next layer
      gx_ref  : (S*B, 4H)  scratch f32: hoisted input projection (all layers)
    """
    S, B, H, L = seq, batch, hidden, num_layers
    n_in = 2 + 3 * (L - 1)
    gx0_ref, w0hh_ref = refs[0], refs[1]
    layer_refs = refs[2:n_in]
    out_ref, hs_ref, gx_ref = refs[n_in], refs[n_in + 1], refs[n_in + 2]
    mm_dtype = w0hh_ref.dtype            # MXU operand dtype (bf16 or f32)

    def lstm_cell(gates, c_prev):
        # gates: (B, 4H) f32, PyTorch order [i, f, g, o].
        if H % 128 == 0:
            # 128-aligned slices -> targeted transcendentals: 3H sigmoid + 1H
            # tanh (+ H tanh(c)) instead of 8H + H full-width. EUP is the
            # binding slot of the elementwise phase at production sizes.
            i_f = jax.nn.sigmoid(gates[:, :2 * H])
            i_g, f_g = i_f[:, :H], i_f[:, H:]
            g_g = jnp.tanh(gates[:, 2 * H:3 * H])
            o_g = jax.nn.sigmoid(gates[:, 3 * H:])
        else:
            # H < 128: slices are not lane-aligned, so two full-width EUP
            # passes + free column slices beat relayout-heavy narrow slices.
            sig = jax.nn.sigmoid(gates)
            tnh = jnp.tanh(gates)
            i_g, f_g = sig[:, :H], sig[:, H:2 * H]
            g_g, o_g = tnh[:, 2 * H:3 * H], sig[:, 3 * H:]
        c_new = f_g * c_prev + i_g * g_g
        h_new = o_g * jnp.tanh(c_new)
        return h_new, c_new

    final_cs = []
    for li in range(L):
        if li == 0:
            # Layer-0 projection was one big wrapper gemm; stage it (as f32)
            # into the shared gx scratch so all layers use the same per-step
            # lane-dense f32 read path.
            gx_ref[...] = gx0_ref[...].astype(jnp.float32)
            whh = w0hh_ref[...]
        else:
            wih_ref, whh_ref, b_ref = layer_refs[3 * (li - 1):3 * (li - 1) + 3]
            # Hoisted input projection: ONE (S*B,H)x(H,4H) gemm off the serial
            # chain; only the (B,H)x(H,4H) recurrent dot stays per-step.
            gx_ref[...] = (jnp.dot(hs_ref[...].astype(mm_dtype), wih_ref[...],
                                   preferred_element_type=jnp.float32)
                           + b_ref[...])
            whh = whh_ref[...]

        h = jnp.zeros((B, H), jnp.float32)
        c = jnp.zeros((B, H), jnp.float32)
        # Static unroll: S is small for this module.
        # TODO(synk): switch to a fori_loop / time-chunked grid for large S.
        for t in range(S):
            lo = t * B
            gates = (gx_ref[pl.ds(lo, B), :]
                     + jnp.dot(h.astype(mm_dtype), whh,
                               preferred_element_type=jnp.float32))
            h, c = lstm_cell(gates, c)
            if li < L - 1:                 # last layer's hidden seq is unused
                hs_ref[pl.ds(lo, B), :] = h
        final_cs.append(c)

    # Single lane-dense store of all final cell states (no narrow slice stores).
    out_ref[...] = jnp.concatenate(final_cs, axis=-1).astype(out_ref.dtype)


def recurrent_layer_forward(x, params, *, matmul_dtype=jnp.bfloat16):
    """x: (B, S, F) batch-first (PyTorch convention).
    params: list of (w_ih, w_hh, b_ih, b_hh) with PyTorch LSTM shapes.
    Returns (B, num_layers * H) == torch.cat(list(cn), dim=-1).

    matmul_dtype=bf16 (default): bf16 MXU operands, f32 accumulation, f32
    carried state — the production configuration.
    matmul_dtype=f32: full-precision verification mode."""
    assert x.ndim == 3, x.shape
    B, S, _ = x.shape
    L = len(params)
    H = params[0][1].shape[1]                        # w_hh: (4H, H)
    mm = matmul_dtype
    full_f32 = jnp.dtype(mm) == jnp.dtype(jnp.float32)
    io_dtype = jnp.float32 if full_f32 else jnp.bfloat16

    # Layer-0 input projection for all timesteps as ONE gemm (fuses the
    # batch-first -> time-major transpose); bias folded in once. bf16 operands
    # (default precision) in production mode; HIGHEST only for f32 verification.
    w0_ih, w0_hh, b0_ih, b0_hh = params[0]
    prec = jax.lax.Precision.HIGHEST if full_f32 else None
    gx0 = jnp.einsum('bsf,gf->sbg', x.astype(mm), w0_ih.astype(mm),
                     precision=prec, preferred_element_type=jnp.float32)
    gx0 = gx0 + (b0_ih + b0_hh).astype(jnp.float32)
    gx0 = gx0.reshape(S * B, 4 * H).astype(io_dtype)   # bf16 halves HBM traffic

    inputs = [gx0, w0_hh.T.astype(mm)]
    for (w_ih, w_hh, b_ih, b_hh) in params[1:]:
        inputs += [w_ih.T.astype(mm),                               # (H, 4H)
                   w_hh.T.astype(mm),                               # (H, 4H)
                   (b_ih + b_hh).reshape(1, 4 * H).astype(jnp.float32)]

    # Explicit VMEM budget with headroom (v5e's scoped default is only 16 MiB;
    # v7x physical VMEM is 64 MiB — keep the cap conservative).
    scratch_bytes = S * B * H * 4 + S * B * 4 * H * 4
    total_bytes = (sum(a.size * a.dtype.itemsize for a in inputs)
                   + B * L * H * 4 + scratch_bytes)
    vmem_limit = int(min(max(4 * 2 ** 20, 3 * total_bytes), 32 * 2 ** 20))

    vmem_spec = pl.BlockSpec(memory_space=pltpu.MemorySpace.VMEM)
    kernel = functools.partial(_fused_lstm_kernel,
                               seq=S, batch=B, hidden=H, num_layers=L)

    return pl.pallas_call(
        kernel,
        out_shape=jax.ShapeDtypeStruct((B, L * H), jnp.float32),
        in_specs=[vmem_spec] * len(inputs),
        out_specs=vmem_spec,
        scratch_shapes=[pltpu.VMEM((S * B, H), jnp.float32),       # hs
                        pltpu.VMEM((S * B, 4 * H), jnp.float32)],  # gx
        compiler_params=pltpu.CompilerParams(vmem_limit_bytes=vmem_limit),
    )(*inputs)


def _lstm_ref(x, params):
    """Pure-JAX reference of the same forward (for verification)."""
    B = x.shape[0]
    inp = x
    cs = []
    for (w_ih, w_hh, b_ih, b_hh) in params:
        H = w_hh.shape[1]
        bias = b_ih + b_hh

        def step(carry, xt):
            h, c = carry
            gates = xt @ w_ih.T + h @ w_hh.T + bias
            i = jax.nn.sigmoid(gates[:, :H])
            f = jax.nn.sigmoid(gates[:, H:2 * H])
            g = jnp.tanh(gates[:, 2 * H:3 * H])
            o = jax.nn.sigmoid(gates[:, 3 * H:])
            c = f * c + i * g
            h = o * jnp.tanh(c)
            return (h, c), h

        init = (jnp.zeros((B, H), jnp.float32), jnp.zeros((B, H), jnp.float32))
        (h, c), hs = jax.lax.scan(step, init, jnp.swapaxes(inp, 0, 1))
        inp = jnp.swapaxes(hs, 0, 1)
        cs.append(c)
    return jnp.concatenate(cs, axis=-1)


def make_lstm_params(key, in_features, hidden, num_layers):
    """Deterministic synthetic parameters with PyTorch LSTM shapes."""
    params = []
    layer_in = in_features
    scale = 1.0 / jnp.sqrt(hidden)
    for _ in range(num_layers):
        key, k1, k2, k3, k4 = jax.random.split(key, 5)
        w_ih = jax.random.uniform(k1, (4 * hidden, layer_in), jnp.float32, -scale, scale)
        w_hh = jax.random.uniform(k2, (4 * hidden, hidden), jnp.float32, -scale, scale)
        b_ih = jax.random.uniform(k3, (4 * hidden,), jnp.float32, -scale, scale)
        b_hh = jax.random.uniform(k4, (4 * hidden,), jnp.float32, -scale, scale)
        params.append((w_ih, w_hh, b_ih, b_hh))
        layer_in = hidden
    return params


if __name__ == "__main__":
    # Small shapes consistent with RecurrentLayer: (batch, seq, in_features).
    # TODO(synk): benchmark/tune at tile-aligned production shapes
    #             (B multiple of 8, H multiple of 128), not at this demo size.
    batch, seq, in_features, hidden, num_layers = 2, 8, 32, 32, 2

    key = jax.random.PRNGKey(0)
    kx, kp = jax.random.split(key)
    x = jax.random.normal(kx, (batch, seq, in_features), jnp.float32)
    params = make_lstm_params(kp, in_features, hidden, num_layers)

    ref = _lstm_ref(x, params)

    # Full-f32 verification path: tight tolerance.
    fwd_f32 = jax.jit(functools.partial(recurrent_layer_forward,
                                        matmul_dtype=jnp.float32))
    out_f32 = jax.block_until_ready(fwd_f32(x, params))
    assert out_f32.shape == (batch, num_layers * hidden), out_f32.shape
    assert jnp.allclose(out_f32, ref, atol=1e-5, rtol=1e-5), \
        f"f32 max err {jnp.max(jnp.abs(out_f32 - ref))}"

    # Production path: bf16 MXU operands, f32 accumulation/state.
    # Tolerance loosened for bf16 error accumulated over the recurrence.
    fwd_bf16 = jax.jit(functools.partial(recurrent_layer_forward,
                                         matmul_dtype=jnp.bfloat16))
    out_bf16 = jax.block_until_ready(fwd_bf16(x, params))
    assert out_bf16.shape == (batch, num_layers * hidden), out_bf16.shape
    assert jnp.allclose(out_bf16, ref, atol=5e-2, rtol=5e-2), \
        f"bf16 max err {jnp.max(jnp.abs(out_bf16 - ref))}"

    print("KERNEL_OK")
</pallas_src>

<mosaic_0001>
module attributes {stable_mosaic.version = 11 : i64} {
  func.func @_fused_lstm_kernel(%arg0: memref<16x128xf32, #tpu.memory_space<vmem>>, %arg1: memref<32x128xf32, #tpu.memory_space<vmem>>, %arg2: memref<32x128xf32, #tpu.memory_space<vmem>>, %arg3: memref<32x128xf32, #tpu.memory_space<vmem>>, %arg4: memref<1x128xf32, #tpu.memory_space<vmem>>, %arg5: memref<2x64xf32, #tpu.memory_space<vmem>>, %arg6: memref<16x32xf32, #tpu.memory_space<vmem>>, %arg7: memref<16x128xf32, #tpu.memory_space<vmem>>) attributes {dimension_semantics = [], scalar_prefetch = 0 : i64, scratch_operands = 2 : i64, tpu.core_type = #tpu.core_type<tc>} {
    %c0 = arith.constant 0 : index
    %c0_0 = arith.constant 0 : index
    %0 = vector.load %arg0[%c0, %c0_0] : memref<16x128xf32, #tpu.memory_space<vmem>>, vector<16x128xf32>
    %c0_1 = arith.constant 0 : index
    %c0_2 = arith.constant 0 : index
    %1 = vector.load %arg7[%c0_1, %c0_2] : memref<16x128xf32, #tpu.memory_space<vmem>>, vector<16x128xf32>
    tpu.vector_store %arg7[%c0_1, %c0_2], %0 {strides = array<i32>} : memref<16x128xf32, #tpu.memory_space<vmem>>, vector<16x128xf32>,
    %c0_3 = arith.constant 0 : index
    %c0_4 = arith.constant 0 : index
    %2 = vector.load %arg1[%c0_3, %c0_4] : memref<32x128xf32, #tpu.memory_space<vmem>>, vector<32x128xf32>
    %cst = arith.constant 0.000000e+00 : f32
    %3 = vector.broadcast %cst : f32 to vector<2x32xf32>
    %cst_5 = arith.constant 0.000000e+00 : f32
    %4 = vector.broadcast %cst_5 : f32 to vector<2x32xf32>
    %c0_6 = arith.constant 0 : index
    %c0_7 = arith.constant 0 : index
    %5 = vector.load %arg7[%c0_6, %c0_7] : memref<16x128xf32, #tpu.memory_space<vmem>>, vector<2x128xf32>
    %cst_8 = arith.constant dense<0.000000e+00> : vector<2x128xf32>
    %6 = tpu.matmul %3, %2, %cst_8 {dimension_numbers = #tpu.dot_dimension_numbers<[1], [0], [0], [1], [0, 0, 1, 1], [], []>} : vector<2x32xf32>, vector<32x128xf32>, vector<2x128xf32> -> vector<2x128xf32>
    %7 = arith.addf %5, %6 : vector<2x128xf32>
    %8 = arith.negf %7 : vector<2x128xf32>
    %9 = math.exp %8 : vector<2x128xf32>
    %cst_9 = arith.constant 1.000000e+00 : f32
    %10 = vector.broadcast %cst_9 : f32 to vector<2x128xf32>
    %11 = arith.addf %10, %9 : vector<2x128xf32>
    %12 = arith.divf %10, %11 : vector<2x128xf32>
    %13 = math.tanh %7 : vector<2x128xf32>
    %14 = vector.extract_strided_slice %12 {offsets = [0, 0], sizes = [2, 32], strides = [1, 1]} : vector<2x128xf32> to vector<2x32xf32>
    %15 = vector.extract_strided_slice %12 {offsets = [0, 32], sizes = [2, 32], strides = [1, 1]} : vector<2x128xf32> to vector<2x32xf32>
    %16 = vector.extract_strided_slice %13 {offsets = [0, 64], sizes = [2, 32], strides = [1, 1]} : vector<2x128xf32> to vector<2x32xf32>
    %17 = vector.extract_strided_slice %12 {offsets = [0, 96], sizes = [2, 32], strides = [1, 1]} : vector<2x128xf32> to vector<2x32xf32>
    %18 = arith.mulf %15, %4 : vector<2x32xf32>
    %19 = arith.mulf %14, %16 : vector<2x32xf32>
    %20 = arith.addf %18, %19 : vector<2x32xf32>
    %21 = math.tanh %20 : vector<2x32xf32>
    %22 = arith.mulf %17, %21 : vector<2x32xf32>
    %c0_10 = arith.constant 0 : index
    %c0_11 = arith.constant 0 : index
    %23 = vector.load %arg6[%c0_10, %c0_11] : memref<16x32xf32, #tpu.memory_space<vmem>>, vector<2x32xf32>
    tpu.vector_store %arg6[%c0_10, %c0_11], %22 {strides = array<i32>} : memref<16x32xf32, #tpu.memory_space<vmem>>, vector<2x32xf32>,
    %c2 = arith.constant 2 : index
    %c0_12 = arith.constant 0 : index
    %24 = vector.load %arg7[%c2, %c0_12] : memref<16x128xf32, #tpu.memory_space<vmem>>, vector<2x128xf32>
    %cst_13 = arith.constant dense<0.000000e+00> : vector<2x128xf32>
    %25 = tpu.matmul %22, %2, %cst_13 {dimension_numbers = #tpu.dot_dimension_numbers<[1], [0], [0], [1], [0, 0, 1, 1], [], []>} : vector<2x32xf32>, vector<32x128xf32>, vector<2x128xf32> -> vector<2x128xf32>
    %26 = arith.addf %24, %25 : vector<2x128xf32>
    %27 = arith.negf %26 : vector<2x128xf32>
    %28 = math.exp %27 : vector<2x128xf32>
    %cst_14 = arith.constant 1.000000e+00 : f32
    %29 = vector.broadcast %cst_14 : f32 to vector<2x128xf32>
    %30 = arith.addf %29, %28 : vector<2x128xf32>
    %31 = arith.divf %29, %30 : vector<2x128xf32>
    %32 = math.tanh %26 : vector<2x128xf32>
    %33 = vector.extract_strided_slice %31 {offsets = [0, 0], sizes = [2, 32], strides = [1, 1]} : vector<2x128xf32> to vector<2x32xf32>
    %34 = vector.extract_strided_slice %31 {offsets = [0, 32], sizes = [2, 32], strides = [1, 1]} : vector<2x128xf32> to vector<2x32xf32>
    %35 = vector.extract_strided_slice %32 {offsets = [0, 64], sizes = [2, 32], strides = [1, 1]} : vector<2x128xf32> to vector<2x32xf32>
    %36 = vector.extract_strided_slice %31 {offsets = [0, 96], sizes = [2, 32], strides = [1, 1]} : vector<2x128xf32> to vector<2x32xf32>
    %37 = arith.mulf %34, %20 : vector<2x32xf32>
    %38 = arith.mulf %33, %35 : vector<2x32xf32>
    %39 = arith.addf %37, %38 : vector<2x32xf32>
    %40 = math.tanh %39 : vector<2x32xf32>
    %41 = arith.mulf %36, %40 : vector<2x32xf32>
    %c2_15 = arith.constant 2 : index
    %c0_16 = arith.constant 0 : index
    %42 = vector.load %arg6[%c2_15, %c0_16] : memref<16x32xf32, #tpu.memory_space<vmem>>, vector<2x32xf32>
    tpu.vector_store %arg6[%c2_15, %c0_16], %41 {strides = array<i32>} : memref<16x32xf32, #tpu.memory_space<vmem>>, vector<2x32xf32>,
    %c4 = arith.constant 4 : index
    %c0_17 = arith.constant 0 : index
    %43 = vector.load %arg7[%c4, %c0_17] : memref<16x128xf32, #tpu.memory_space<vmem>>, vector<2x128xf32>
    %cst_18 = arith.constant dense<0.000000e+00> : vector<2x128xf32>
    %44 = tpu.matmul %41, %2, %cst_18 {dimension_numbers = #tpu.dot_dimension_numbers<[1], [0], [0], [1], [0, 0, 1, 1], [], []>} : vector<2x32xf32>, vector<32x128xf32>, vector<2x128xf32> -> vector<2x128xf32>
    %45 = arith.addf %43, %44 : vector<2x128xf32>
    %46 = arith.negf %45 : vector<2x128xf32>
    %47 = math.exp %46 : vector<2x128xf32>
    %cst_19 = arith.constant 1.000000e+00 : f32
    %48 = vector.broadcast %cst_19 : f32 to vector<2x128xf32>
    %49 = arith.addf %48, %47 : vector<2x128xf32>
    %50 = arith.divf %48, %49 : vector<2x128xf32>
    %51 = math.tanh %45 : vector<2x128xf32>
    %52 = vector.extract_strided_slice %50 {offsets = [0, 0], sizes = [2, 32], strides = [1, 1]} : vector<2x128xf32> to vector<2x32xf32>
    %53 = vector.extract_strided_slice %50 {offsets = [0, 32], sizes = [2, 32], strides = [1, 1]} : vector<2x128xf32> to vector<2x32xf32>
    %54 = vector.extract_strided_slice %51 {offsets = [0, 64], sizes = [2, 32], strides = [1, 1]} : vector<2x128xf32> to vector<2x32xf32>
    %55 = vector.extract_strided_slice %50 {offsets = [0, 96], sizes = [2, 32], strides = [1, 1]} : vector<2x128xf32> to vector<2x32xf32>
    %56 = arith.mulf %53, %39 : vector<2x32xf32>
    %57 = arith.mulf %52, %54 : vector<2x32xf32>
    %58 = arith.addf %56, %57 : vector<2x32xf32>
    %59 = math.tanh %58 : vector<2x32xf32>
    %60 = arith.mulf %55, %59 : vector<2x32xf32>
    %c4_20 = arith.constant 4 : index
    %c0_21 = arith.constant 0 : index
    %61 = vector.load %arg6[%c4_20, %c0_21] : memref<16x32xf32, #tpu.memory_space<vmem>>, vector<2x32xf32>
    tpu.vector_store %arg6[%c4_20, %c0_21], %60 {strides = array<i32>} : memref<16x32xf32, #tpu.memory_space<vmem>>, vector<2x32xf32>,
    %c6 = arith.constant 6 : index
    %c0_22 = arith.constant 0 : index
    %62 = vector.load %arg7[%c6, %c0_22] : memref<16x128xf32, #tpu.memory_space<vmem>>, vector<2x128xf32>
    %cst_23 = arith.constant dense<0.000000e+00> : vector<2x128xf32>
    %63 = tpu.matmul %60, %2, %cst_23 {dimension_numbers = #tpu.dot_dimension_numbers<[1], [0], [0], [1], [0, 0, 1, 1], [], []>} : vector<2x32xf32>, vector<32x128xf32>, vector<2x128xf32> -> vector<2x128xf32>
    %64 = arith.addf %62, %63 : vector<2x128xf32>
    %65 = arith.negf %64 : vector<2x128xf32>
    %66 = math.exp %65 : vector<2x128xf32>
    %cst_24 = arith.constant 1.000000e+00 : f32
    %67 = vector.broadcast %cst_24 : f32 to vector<2x128xf32>
    %68 = arith.addf %67, %66 : vector<2x128xf32>
    %69 = arith.divf %67, %68 : vector<2x128xf32>
    %70 = math.tanh %64 : vector<2x128xf32>
    %71 = vector.extract_strided_slice %69 {offsets = [0, 0], sizes = [2, 32], strides = [1, 1]} : vector<2x128xf32> to vector<2x32xf32>
    %72 = vector.extract_strided_slice %69 {offsets = [0, 32], sizes = [2, 32], strides = [1, 1]} : vector<2x128xf32> to vector<2x32xf32>
    %73 = vector.extract_strided_slice %70 {offsets = [0, 64], sizes = [2, 32], strides = [1, 1]} : vector<2x128xf32> to vector<2x32xf32>
    %74 = vector.extract_strided_slice %69 {offsets = [0, 96], sizes = [2, 32], strides = [1, 1]} : vector<2x128xf32> to vector<2x32xf32>
    %75 = arith.mulf %72, %58 : vector<2x32xf32>
    %76 = arith.mulf %71, %73 : vector<2x32xf32>
    %77 = arith.addf %75, %76 : vector<2x32xf32>
    %78 = math.tanh %77 : vector<2x32xf32>
    %79 = arith.mulf %74, %78 : vector<2x32xf32>
    %c6_25 = arith.constant 6 : index
    %c0_26 = arith.constant 0 : index
    %80 = vector.load %arg6[%c6_25, %c0_26] : memref<16x32xf32, #tpu.memory_space<vmem>>, vector<2x32xf32>
    tpu.vector_store %arg6[%c6_25, %c0_26], %79 {strides = array<i32>} : memref<16x32xf32, #tpu.memory_space<vmem>>, vector<2x32xf32>,
    %c8 = arith.constant 8 : index
    %c0_27 = arith.constant 0 : index
    %81 = vector.load %arg7[%c8, %c0_27] : memref<16x128xf32, #tpu.memory_space<vmem>>, vector<2x128xf32>
    %cst_28 = arith.constant dense<0.000000e+00> : vector<2x128xf32>
    %82 = tpu.matmul %79, %2, %cst_28 {dimension_numbers = #tpu.dot_dimension_numbers<[1], [0], [0], [1], [0, 0, 1, 1], [], []>} : vector<2x32xf32>, vector<32x128xf32>, vector<2x128xf32> -> vector<2x128xf32>
    %83 = arith.addf %81, %82 : vector<2x128xf32>
    %84 = arith.negf %83 : vector<2x128xf32>
    %85 = math.exp %84 : vector<2x128xf32>
    %cst_29 = arith.constant 1.000000e+00 : f32
    %86 = vector.broadcast %cst_29 : f32 to vector<2x128xf32>
    %87 = arith.addf %86, %85 : vector<2x128xf32>
    %88 = arith.divf %86, %87 : vector<2x128xf32>
    %89 = math.tanh %83 : vector<2x128xf32>
    %90 = vector.extract_strided_slice %88 {offsets = [0, 0], sizes = [2, 32], strides = [1, 1]} : vector<2x128xf32> to vector<2x32xf32>
    %91 = vector.extract_strided_slice %88 {offsets = [0, 32], sizes = [2, 32], strides = [1, 1]} : vector<2x128xf32> to vector<2x32xf32>
    %92 = vector.extract_strided_slice %89 {offsets = [0, 64], sizes = [2, 32], strides = [1, 1]} : vector<2x128xf32> to vector<2x32xf32>
    %93 = vector.extract_strided_slice %88 {offsets = [0, 96], sizes = [2, 32], strides = [1, 1]} : vector<2x128xf32> to vector<2x32xf32>
    %94 = arith.mulf %91, %77 : vector<2x32xf32>
    %95 = arith.mulf %90, %92 : vector<2x32xf32>
    %96 = arith.addf %94, %95 : vector<2x32xf32>
    %97 = math.tanh %96 : vector<2x32xf32>
    %98 = arith.mulf %93, %97 : vector<2x32xf32>
    %c8_30 = arith.constant 8 : index
    %c0_31 = arith.constant 0 : index
    %99 = vector.load %arg6[%c8_30, %c0_31] : memref<16x32xf32, #tpu.memory_space<vmem>>, vector<2x32xf32>
    tpu.vector_store %arg6[%c8_30, %c0_31], %98 {strides = array<i32>} : memref<16x32xf32, #tpu.memory_space<vmem>>, vector<2x32xf32>,
    %c10 = arith.constant 10 : index
    %c0_32 = arith.constant 0 : index
    %100 = vector.load %arg7[%c10, %c0_32] : memref<16x128xf32, #tpu.memory_space<vmem>>, vector<2x128xf32>
    %cst_33 = arith.constant dense<0.000000e+00> : vector<2x128xf32>
    %101 = tpu.matmul %98, %2, %cst_33 {dimension_numbers = #tpu.dot_dimension_numbers<[1], [0], [0], [1], [0, 0, 1, 1], [], []>} : vector<2x32xf32>, vector<32x128xf32>, vector<2x128xf32> -> vector<2x128xf32>
    %102 = arith.addf %100, %101 : vector<2x128xf32>
    %103 = arith.negf %102 : vector<2x128xf32>
    %104 = math.exp %103 : vector<2x128xf32>
    %cst_34 = arith.constant 1.000000e+00 : f32
    %105 = vector.broadcast %cst_34 : f32 to vector<2x128xf32>
    %106 = arith.addf %105, %104 : vector<2x128xf32>
    %107 = arith.divf %105, %106 : vector<2x128xf32>
    %108 = math.tanh %102 : vector<2x128xf32>
    %109 = vector.extract_strided_slice %107 {offsets = [0, 0], sizes = [2, 32], strides = [1, 1]} : vector<2x128xf32> to vector<2x32xf32>
    %110 = vector.extract_strided_slice %107 {offsets = [0, 32], sizes = [2, 32], strides = [1, 1]} : vector<2x128xf32> to vector<2x32xf32>
    %111 = vector.extract_strided_slice %108 {offsets = [0, 64], sizes = [2, 32], strides = [1, 1]} : vector<2x128xf32> to vector<2x32xf32>
    %112 = vector.extract_strided_slice %107 {offsets = [0, 96], sizes = [2, 32], strides = [1, 1]} : vector<2x128xf32> to vector<2x32xf32>
    %113 = arith.mulf %110, %96 : vector<2x32xf32>
    %114 = arith.mulf %109, %111 : vector<2x32xf32>
    %115 = arith.addf %113, %114 : vector<2x32xf32>
    %116 = math.tanh %115 : vector<2x32xf32>
    %117 = arith.mulf %112, %116 : vector<2x32xf32>
    %c10_35 = arith.constant 10 : index
    %c0_36 = arith.constant 0 : index
    %118 = vector.load %arg6[%c10_35, %c0_36] : memref<16x32xf32, #tpu.memory_space<vmem>>, vector<2x32xf32>
    tpu.vector_store %arg6[%c10_35, %c0_36], %117 {strides = array<i32>} : memref<16x32xf32, #tpu.memory_space<vmem>>, vector<2x32xf32>,
    %c12 = arith.constant 12 : index
    %c0_37 = arith.constant 0 : index
    %119 = vector.load %arg7[%c12, %c0_37] : memref<16x128xf32, #tpu.memory_space<vmem>>, vector<2x128xf32>
    %cst_38 = arith.constant dense<0.000000e+00> : vector<2x128xf32>
    %120 = tpu.matmul %117, %2, %cst_38 {dimension_numbers = #tpu.dot_dimension_numbers<[1], [0], [0], [1], [0, 0, 1, 1], [], []>} : vector<2x32xf32>, vector<32x128xf32>, vector<2x128xf32> -> vector<2x128xf32>
    %121 = arith.addf %119, %120 : vector<2x128xf32>
    %122 = arith.negf %121 : vector<2x128xf32>
    %123 = math.exp %122 : vector<2x128xf32>
    %cst_39 = arith.constant 1.000000e+00 : f32
    %124 = vector.broadcast %cst_39 : f32 to vector<2x128xf32>
    %125 = arith.addf %124, %123 : vector<2x128xf32>
    %126 = arith.divf %124, %125 : vector<2x128xf32>
    %127 = math.tanh %121 : vector<2x128xf32>
    %128 = vector.extract_strided_slice %126 {offsets = [0, 0], sizes = [2, 32], strides = [1, 1]} : vector<2x128xf32> to vector<2x32xf32>
    %129 = vector.extract_strided_slice %126 {offsets = [0, 32], sizes = [2, 32], strides = [1, 1]} : vector<2x128xf32> to vector<2x32xf32>
    %130 = vector.extract_strided_slice %127 {offsets = [0, 64], sizes = [2, 32], strides = [1, 1]} : vector<2x128xf32> to vector<2x32xf32>
    %131 = vector.extract_strided_slice %126 {offsets = [0, 96], sizes = [2, 32], strides = [1, 1]} : vector<2x128xf32> to vector<2x32xf32>
    %132 = arith.mulf %129, %115 : vector<2x32xf32>
    %133 = arith.mulf %128, %130 : vector<2x32xf32>
    %134 = arith.addf %132, %133 : vector<2x32xf32>
    %135 = math.tanh %134 : vector<2x32xf32>
    %136 = arith.mulf %131, %135 : vector<2x32xf32>
    %c12_40 = arith.constant 12 : index
    %c0_41 = arith.constant 0 : index
    %137 = vector.load %arg6[%c12_40, %c0_41] : memref<16x32xf32, #tpu.memory_space<vmem>>, vector<2x32xf32>
    tpu.vector_store %arg6[%c12_40, %c0_41], %136 {strides = array<i32>} : memref<16x32xf32, #tpu.memory_space<vmem>>, vector<2x32xf32>,
    %c14 = arith.constant 14 : index
    %c0_42 = arith.constant 0 : index
    %138 = vector.load %arg7[%c14, %c0_42] : memref<16x128xf32, #tpu.memory_space<vmem>>, vector<2x128xf32>
    %cst_43 = arith.constant dense<0.000000e+00> : vector<2x128xf32>
    %139 = tpu.matmul %136, %2, %cst_43 {dimension_numbers = #tpu.dot_dimension_numbers<[1], [0], [0], [1], [0, 0, 1, 1], [], []>} : vector<2x32xf32>, vector<32x128xf32>, vector<2x128xf32> -> vector<2x128xf32>
    %140 = arith.addf %138, %139 : vector<2x128xf32>
    %141 = arith.negf %140 : vector<2x128xf32>
    %142 = math.exp %141 : vector<2x128xf32>
    %cst_44 = arith.constant 1.000000e+00 : f32
    %143 = vector.broadcast %cst_44 : f32 to vector<2x128xf32>
    %144 = arith.addf %143, %142 : vector<2x128xf32>
    %145 = arith.divf %143, %144 : vector<2x128xf32>
    %146 = math.tanh %140 : vector<2x128xf32>
    %147 = vector.extract_strided_slice %145 {offsets = [0, 0], sizes = [2, 32], strides = [1, 1]} : vector<2x128xf32> to vector<2x32xf32>
    %148 = vector.extract_strided_slice %145 {offsets = [0, 32], sizes = [2, 32], strides = [1, 1]} : vector<2x128xf32> to vector<2x32xf32>
    %149 = vector.extract_strided_slice %146 {offsets = [0, 64], sizes = [2, 32], strides = [1, 1]} : vector<2x128xf32> to vector<2x32xf32>
    %150 = vector.extract_strided_slice %145 {offsets = [0, 96], sizes = [2, 32], strides = [1, 1]} : vector<2x128xf32> to vector<2x32xf32>
    %151 = arith.mulf %148, %134 : vector<2x32xf32>
    %152 = arith.mulf %147, %149 : vector<2x32xf32>
    %153 = arith.addf %151, %152 : vector<2x32xf32>
    %154 = math.tanh %153 : vector<2x32xf32>
    %155 = arith.mulf %150, %154 : vector<2x32xf32>
    %c14_45 = arith.constant 14 : index
    %c0_46 = arith.constant 0 : index
    %156 = vector.load %arg6[%c14_45, %c0_46] : memref<16x32xf32, #tpu.memory_space<vmem>>, vector<2x32xf32>
    tpu.vector_store %arg6[%c14_45, %c0_46], %155 {strides = array<i32>} : memref<16x32xf32, #tpu.memory_space<vmem>>, vector<2x32xf32>,
    %c0_47 = arith.constant 0 : index
    %c0_48 = arith.constant 0 : index
    %157 = vector.load %arg6[%c0_47, %c0_48] : memref<16x32xf32, #tpu.memory_space<vmem>>, vector<16x32xf32>
    %c0_49 = arith.constant 0 : index
    %c0_50 = arith.constant 0 : index
    %158 = vector.load %arg2[%c0_49, %c0_50] : memref<32x128xf32, #tpu.memory_space<vmem>>, vector<32x128xf32>
    %cst_51 = arith.constant dense<0.000000e+00> : vector<16x128xf32>
    %159 = tpu.matmul %157, %158, %cst_51 {dimension_numbers = #tpu.dot_dimension_numbers<[1], [0], [0], [1], [0, 0, 1, 1], [], []>} : vector<16x32xf32>, vector<32x128xf32>, vector<16x128xf32> -> vector<16x128xf32>
    %c0_52 = arith.constant 0 : index
    %c0_53 = arith.constant 0 : index
    %160 = vector.load %arg4[%c0_52, %c0_53] : memref<1x128xf32, #tpu.memory_space<vmem>>, vector<1x128xf32>
    %161 = vector.broadcast %160 : vector<1x128xf32> to vector<16x128xf32>
    %162 = arith.addf %159, %161 : vector<16x128xf32>
    %c0_54 = arith.constant 0 : index
    %c0_55 = arith.constant 0 : index
    %163 = vector.load %arg7[%c0_54, %c0_55] : memref<16x128xf32, #tpu.memory_space<vmem>>, vector<16x128xf32>
    tpu.vector_store %arg7[%c0_54, %c0_55], %162 {strides = array<i32>} : memref<16x128xf32, #tpu.memory_space<vmem>>, vector<16x128xf32>,
    %c0_56 = arith.constant 0 : index
    %c0_57 = arith.constant 0 : index
    %164 = vector.load %arg3[%c0_56, %c0_57] : memref<32x128xf32, #tpu.memory_space<vmem>>, vector<32x128xf32>
    %cst_58 = arith.constant 0.000000e+00 : f32
    %165 = vector.broadcast %cst_58 : f32 to vector<2x32xf32>
    %cst_59 = arith.constant 0.000000e+00 : f32
    %166 = vector.broadcast %cst_59 : f32 to vector<2x32xf32>
    %c0_60 = arith.constant 0 : index
    %c0_61 = arith.constant 0 : index
    %167 = vector.load %arg7[%c0_60, %c0_61] : memref<16x128xf32, #tpu.memory_space<vmem>>, vector<2x128xf32>
    %cst_62 = arith.constant dense<0.000000e+00> : vector<2x128xf32>
    %168 = tpu.matmul %165, %164, %cst_62 {dimension_numbers = #tpu.dot_dimension_numbers<[1], [0], [0], [1], [0, 0, 1, 1], [], []>} : vector<2x32xf32>, vector<32x128xf32>, vector<2x128xf32> -> vector<2x128xf32>
    %169 = arith.addf %167, %168 : vector<2x128xf32>
    %170 = arith.negf %169 : vector<2x128xf32>
    %171 = math.exp %170 : vector<2x128xf32>
    %cst_63 = arith.constant 1.000000e+00 : f32
    %172 = vector.broadcast %cst_63 : f32 to vector<2x128xf32>
    %173 = arith.addf %172, %171 : vector<2x128xf32>
    %174 = arith.divf %172, %173 : vector<2x128xf32>
    %175 = math.tanh %169 : vector<2x128xf32>
    %176 = vector.extract_strided_slice %174 {offsets = [0, 0], sizes = [2, 32], strides = [1, 1]} : vector<2x128xf32> to vector<2x32xf32>
    %177 = vector.extract_strided_slice %174 {offsets = [0, 32], sizes = [2, 32], strides = [1, 1]} : vector<2x128xf32> to vector<2x32xf32>
    %178 = vector.extract_strided_slice %175 {offsets = [0, 64], sizes = [2, 32], strides = [1, 1]} : vector<2x128xf32> to vector<2x32xf32>
    %179 = vector.extract_strided_slice %174 {offsets = [0, 96], sizes = [2, 32], strides = [1, 1]} : vector<2x128xf32> to vector<2x32xf32>
    %180 = arith.mulf %177, %166 : vector<2x32xf32>
    %181 = arith.mulf %176, %178 : vector<2x32xf32>
    %182 = arith.addf %180, %181 : vector<2x32xf32>
    %183 = math.tanh %182 : vector<2x32xf32>
    %184 = arith.mulf %179, %183 : vector<2x32xf32>
    %c2_64 = arith.constant 2 : index
    %c0_65 = arith.constant 0 : index
    %185 = vector.load %arg7[%c2_64, %c0_65] : memref<16x128xf32, #tpu.memory_space<vmem>>, vector<2x128xf32>
    %cst_66 = arith.constant dense<0.000000e+00> : vector<2x128xf32>
    %186 = tpu.matmul %184, %164, %cst_66 {dimension_numbers = #tpu.dot_dimension_numbers<[1], [0], [0], [1], [0, 0, 1, 1], [], []>} : vector<2x32xf32>, vector<32x128xf32>, vector<2x128xf32> -> vector<2x128xf32>
    %187 = arith.addf %185, %186 : vector<2x128xf32>
    %188 = arith.negf %187 : vector<2x128xf32>
    %189 = math.exp %188 : vector<2x128xf32>
    %cst_67 = arith.constant 1.000000e+00 : f32
    %190 = vector.broadcast %cst_67 : f32 to vector<2x128xf32>
    %191 = arith.addf %190, %189 : vector<2x128xf32>
    %192 = arith.divf %190, %191 : vector<2x128xf32>
    %193 = math.tanh %187 : vector<2x128xf32>
    %194 = vector.extract_strided_slice %192 {offsets = [0, 0], sizes = [2, 32], strides = [1, 1]} : vector<2x128xf32> to vector<2x32xf32>
    %195 = vector.extract_strided_slice %192 {offsets = [0, 32], sizes = [2, 32], strides = [1, 1]} : vector<2x128xf32> to vector<2x32xf32>
    %196 = vector.extract_strided_slice %193 {offsets = [0, 64], sizes = [2, 32], strides = [1, 1]} : vector<2x128xf32> to vector<2x32xf32>
    %197 = vector.extract_strided_slice %192 {offsets = [0, 96], sizes = [2, 32], strides = [1, 1]} : vector<2x128xf32> to vector<2x32xf32>
    %198 = arith.mulf %195, %182 : vector<2x32xf32>
    %199 = arith.mulf %194, %196 : vector<2x32xf32>
    %200 = arith.addf %198, %199 : vector<2x32xf32>
    %201 = math.tanh %200 : vector<2x32xf32>
    %202 = arith.mulf %197, %201 : vector<2x32xf32>
    %c4_68 = arith.constant 4 : index
    %c0_69 = arith.constant 0 : index
    %203 = vector.load %arg7[%c4_68, %c0_69] : memref<16x128xf32, #tpu.memory_space<vmem>>, vector<2x128xf32>
    %cst_70 = arith.constant dense<0.000000e+00> : vector<2x128xf32>
    %204 = tpu.matmul %202, %164, %cst_70 {dimension_numbers = #tpu.dot_dimension_numbers<[1], [0], [0], [1], [0, 0, 1, 1], [], []>} : vector<2x32xf32>, vector<32x128xf32>, vector<2x128xf32> -> vector<2x128xf32>
    %205 = arith.addf %203, %204 : vector<2x128xf32>
    %206 = arith.negf %205 : vector<2x128xf32>
    %207 = math.exp %206 : vector<2x128xf32>
    %cst_71 = arith.constant 1.000000e+00 : f32
    %208 = vector.broadcast %cst_71 : f32 to vector<2x128xf32>
    %209 = arith.addf %208, %207 : vector<2x128xf32>
    %210 = arith.divf %208, %209 : vector<2x128xf32>
    %211 = math.tanh %205 : vector<2x128xf32>
    %212 = vector.extract_strided_slice %210 {offsets = [0, 0], sizes = [2, 32], strides = [1, 1]} : vector<2x128xf32> to vector<2x32xf32>
    %213 = vector.extract_strided_slice %210 {offsets = [0, 32], sizes = [2, 32], strides = [1, 1]} : vector<2x128xf32> to vector<2x32xf32>
    %214 = vector.extract_strided_slice %211 {offsets = [0, 64], sizes = [2, 32], strides = [1, 1]} : vector<2x128xf32> to vector<2x32xf32>
    %215 = vector.extract_strided_slice %210 {offsets = [0, 96], sizes = [2, 32], strides = [1, 1]} : vector<2x128xf32> to vector<2x32xf32>
    %216 = arith.mulf %213, %200 : vector<2x32xf32>
    %217 = arith.mulf %212, %214 : vector<2x32xf32>
    %218 = arith.addf %216, %217 : vector<2x32xf32>
    %219 = math.tanh %218 : vector<2x32xf32>
    %220 = arith.mulf %215, %219 : vector<2x32xf32>
    %c6_72 = arith.constant 6 : index
    %c0_73 = arith.constant 0 : index
    %221 = vector.load %arg7[%c6_72, %c0_73] : memref<16x128xf32, #tpu.memory_space<vmem>>, vector<2x128xf32>
    %cst_74 = arith.constant dense<0.000000e+00> : vector<2x128xf32>
    %222 = tpu.matmul %220, %164, %cst_74 {dimension_numbers = #tpu.dot_dimension_numbers<[1], [0], [0], [1], [0, 0, 1, 1], [], []>} : vector<2x32xf32>, vector<32x128xf32>, vector<2x128xf32> -> vector<2x128xf32>
    %223 = arith.addf %221, %222 : vector<2x128xf32>
    %224 = arith.negf %223 : vector<2x128xf32>
    %225 = math.exp %224 : vector<2x128xf32>
    %cst_75 = arith.constant 1.000000e+00 : f32
    %226 = vector.broadcast %cst_75 : f32 to vector<2x128xf32>
    %227 = arith.addf %226, %225 : vector<2x128xf32>
    %228 = arith.divf %226, %227 : vector<2x128xf32>
    %229 = math.tanh %223 : vector<2x128xf32>
    %230 = vector.extract_strided_slice %228 {offsets = [0, 0], sizes = [2, 32], strides = [1, 1]} : vector<2x128xf32> to vector<2x32xf32>
    %231 = vector.extract_strided_slice %228 {offsets = [0, 32], sizes = [2, 32], strides = [1, 1]} : vector<2x128xf32> to vector<2x32xf32>
    %232 = vector.extract_strided_slice %229 {offsets = [0, 64], sizes = [2, 32], strides = [1, 1]} : vector<2x128xf32> to vector<2x32xf32>
    %233 = vector.extract_strided_slice %228 {offsets = [0, 96], sizes = [2, 32], strides = [1, 1]} : vector<2x128xf32> to vector<2x32xf32>
    %234 = arith.mulf %231, %218 : vector<2x32xf32>
    %235 = arith.mulf %230, %232 : vector<2x32xf32>
    %236 = arith.addf %234, %235 : vector<2x32xf32>
    %237 = math.tanh %236 : vector<2x32xf32>
    %238 = arith.mulf %233, %237 : vector<2x32xf32>
    %c8_76 = arith.constant 8 : index
    %c0_77 = arith.constant 0 : index
    %239 = vector.load %arg7[%c8_76, %c0_77] : memref<16x128xf32, #tpu.memory_space<vmem>>, vector<2x128xf32>
    %cst_78 = arith.constant dense<0.000000e+00> : vector<2x128xf32>
    %240 = tpu.matmul %238, %164, %cst_78 {dimension_numbers = #tpu.dot_dimension_numbers<[1], [0], [0], [1], [0, 0, 1, 1], [], []>} : vector<2x32xf32>, vector<32x128xf32>, vector<2x128xf32> -> vector<2x128xf32>
    %241 = arith.addf %239, %240 : vector<2x128xf32>
    %242 = arith.negf %241 : vector<2x128xf32>
    %243 = math.exp %242 : vector<2x128xf32>
    %cst_79 = arith.constant 1.000000e+00 : f32
    %244 = vector.broadcast %cst_79 : f32 to vector<2x128xf32>
    %245 = arith.addf %244, %243 : vector<2x128xf32>
    %246 = arith.divf %244, %245 : vector<2x128xf32>
    %247 = math.tanh %241 : vector<2x128xf32>
    %248 = vector.extract_strided_slice %246 {offsets = [0, 0], sizes = [2, 32], strides = [1, 1]} : vector<2x128xf32> to vector<2x32xf32>
    %249 = vector.extract_strided_slice %246 {offsets = [0, 32], sizes = [2, 32], strides = [1, 1]} : vector<2x128xf32> to vector<2x32xf32>
    %250 = vector.extract_strided_slice %247 {offsets = [0, 64], sizes = [2, 32], strides = [1, 1]} : vector<2x128xf32> to vector<2x32xf32>
    %251 = vector.extract_strided_slice %246 {offsets = [0, 96], sizes = [2, 32], strides = [1, 1]} : vector<2x128xf32> to vector<2x32xf32>
    %252 = arith.mulf %249, %236 : vector<2x32xf32>
    %253 = arith.mulf %248, %250 : vector<2x32xf32>
    %254 = arith.addf %252, %253 : vector<2x32xf32>
    %255 = math.tanh %254 : vector<2x32xf32>
    %256 = arith.mulf %251, %255 : vector<2x32xf32>
    %c10_80 = arith.constant 10 : index
    %c0_81 = arith.constant 0 : index
    %257 = vector.load %arg7[%c10_80, %c0_81] : memref<16x128xf32, #tpu.memory_space<vmem>>, vector<2x128xf32>
    %cst_82 = arith.constant dense<0.000000e+00> : vector<2x128xf32>
    %258 = tpu.matmul %256, %164, %cst_82 {dimension_numbers = #tpu.dot_dimension_numbers<[1], [0], [0], [1], [0, 0, 1, 1], [], []>} : vector<2x32xf32>, vector<32x128xf32>, vector<2x128xf32> -> vector<2x128xf32>
    %259 = arith.addf %257, %258 : vector<2x128xf32>
    %260 = arith.negf %259 : vector<2x128xf32>
    %261 = math.exp %260 : vector<2x128xf32>
    %cst_83 = arith.constant 1.000000e+00 : f32
    %262 = vector.broadcast %cst_83 : f32 to vector<2x128xf32>
    %263 = arith.addf %262, %261 : vector<2x128xf32>
    %264 = arith.divf %262, %263 : vector<2x128xf32>
    %265 = math.tanh %259 : vector<2x128xf32>
    %266 = vector.extract_strided_slice %264 {offsets = [0, 0], sizes = [2, 32], strides = [1, 1]} : vector<2x128xf32> to vector<2x32xf32>
    %267 = vector.extract_strided_slice %264 {offsets = [0, 32], sizes = [2, 32], strides = [1, 1]} : vector<2x128xf32> to vector<2x32xf32>
    %268 = vector.extract_strided_slice %265 {offsets = [0, 64], sizes = [2, 32], strides = [1, 1]} : vector<2x128xf32> to vector<2x32xf32>
    %269 = vector.extract_strided_slice %264 {offsets = [0, 96], sizes = [2, 32], strides = [1, 1]} : vector<2x128xf32> to vector<2x32xf32>
    %270 = arith.mulf %267, %254 : vector<2x32xf32>
    %271 = arith.mulf %266, %268 : vector<2x32xf32>
    %272 = arith.addf %270, %271 : vector<2x32xf32>
    %273 = math.tanh %272 : vector<2x32xf32>
    %274 = arith.mulf %269, %273 : vector<2x32xf32>
    %c12_84 = arith.constant 12 : index
    %c0_85 = arith.constant 0 : index
    %275 = vector.load %arg7[%c12_84, %c0_85] : memref<16x128xf32, #tpu.memory_space<vmem>>, vector<2x128xf32>
    %cst_86 = arith.constant dense<0.000000e+00> : vector<2x128xf32>
    %276 = tpu.matmul %274, %164, %cst_86 {dimension_numbers = #tpu.dot_dimension_numbers<[1], [0], [0], [1], [0, 0, 1, 1], [], []>} : vector<2x32xf32>, vector<32x128xf32>, vector<2x128xf32> -> vector<2x128xf32>
    %277 = arith.addf %275, %276 : vector<2x128xf32>
    %278 = arith.negf %277 : vector<2x128xf32>
    %279 = math.exp %278 : vector<2x128xf32>
    %cst_87 = arith.constant 1.000000e+00 : f32
    %280 = vector.broadcast %cst_87 : f32 to vector<2x128xf32>
    %281 = arith.addf %280, %279 : vector<2x128xf32>
    %282 = arith.divf %280, %281 : vector<2x128xf32>
    %283 = math.tanh %277 : vector<2x128xf32>
    %284 = vector.extract_strided_slice %282 {offsets = [0, 0], sizes = [2, 32], strides = [1, 1]} : vector<2x128xf32> to vector<2x32xf32>
    %285 = vector.extract_strided_slice %282 {offsets = [0, 32], sizes = [2, 32], strides = [1, 1]} : vector<2x128xf32> to vector<2x32xf32>
    %286 = vector.extract_strided_slice %283 {offsets = [0, 64], sizes = [2, 32], strides = [1, 1]} : vector<2x128xf32> to vector<2x32xf32>
    %287 = vector.extract_strided_slice %282 {offsets = [0, 96], sizes = [2, 32], strides = [1, 1]} : vector<2x128xf32> to vector<2x32xf32>
    %288 = arith.mulf %285, %272 : vector<2x32xf32>
    %289 = arith.mulf %284, %286 : vector<2x32xf32>
    %290 = arith.addf %288, %289 : vector<2x32xf32>
    %291 = math.tanh %290 : vector<2x32xf32>
    %292 = arith.mulf %287, %291 : vector<2x32xf32>
    %c14_88 = arith.constant 14 : index
    %c0_89 = arith.constant 0 : index
    %293 = vector.load %arg7[%c14_88, %c0_89] : memref<16x128xf32, #tpu.memory_space<vmem>>, vector<2x128xf32>
    %cst_90 = arith.constant dense<0.000000e+00> : vector<2x128xf32>
    %294 = tpu.matmul %292, %164, %cst_90 {dimension_numbers = #tpu.dot_dimension_numbers<[1], [0], [0], [1], [0, 0, 1, 1], [], []>} : vector<2x32xf32>, vector<32x128xf32>, vector<2x128xf32> -> vector<2x128xf32>
    %295 = arith.addf %293, %294 : vector<2x128xf32>
    %296 = arith.negf %295 : vector<2x128xf32>
    %297 = math.exp %296 : vector<2x128xf32>
    %cst_91 = arith.constant 1.000000e+00 : f32
    %298 = vector.broadcast %cst_91 : f32 to vector<2x128xf32>
    %299 = arith.addf %298, %297 : vector<2x128xf32>
    %300 = arith.divf %298, %299 : vector<2x128xf32>
    %301 = math.tanh %295 : vector<2x128xf32>
    %302 = vector.extract_strided_slice %300 {offsets = [0, 0], sizes = [2, 32], strides = [1, 1]} : vector<2x128xf32> to vector<2x32xf32>
    %303 = vector.extract_strided_slice %300 {offsets = [0, 32], sizes = [2, 32], strides = [1, 1]} : vector<2x128xf32> to vector<2x32xf32>
    %304 = vector.extract_strided_slice %301 {offsets = [0, 64], sizes = [2, 32], strides = [1, 1]} : vector<2x128xf32> to vector<2x32xf32>
    %305 = arith.mulf %303, %290 : vector<2x32xf32>
    %306 = arith.mulf %302, %304 : vector<2x32xf32>
    %307 = arith.addf %305, %306 : vector<2x32xf32>
    %308 = tpu.concatenate %153, %307 in 1 : vector<2x32xf32>, vector<2x32xf32> -> vector<2x64xf32>
    %c0_92 = arith.constant 0 : index
    %c0_93 = arith.constant 0 : index
    %309 = vector.load %arg5[%c0_92, %c0_93] : memref<2x64xf32, #tpu.memory_space<vmem>>, vector<2x64xf32>
    tpu.vector_store %arg5[%c0_92, %c0_93], %308 {strides = array<i32>} : memref<2x64xf32, #tpu.memory_space<vmem>>, vector<2x64xf32>,
    return
  }
}

</mosaic_0001>

<llo_original>
// kernel: recurrent_layer_forward.1
$region0: #{recurrent_layer_forward.1}
  #allocation0 [shape = 'u32[]', space=smem, size = 0x4, offset = 0x4, fixed_abs, tag = 'smem constant byte address 0x4 - core index']
  #allocation1 [shape = 'u32[72,128]{1,0:T(1,128)}', space=vmem, size = 0x9000, scoped, tag = 'internal scratch']
  #allocation2 [shape = 'f32[16,32]{1,0:T(8,128)}', space=vmem, size = 0x2000, scoped, tag = 'scratch operand']
  #allocation3 [shape = 'f32[16,128]{1,0:T(8,128)}', space=vmem, size = 0x2000, scoped, tag = 'scratch operand']
  %s0 = inlined_call_operand.vmem [shape: f32[16,128], index: 0, kind: input, shape index: {}]
  %s1 = inlined_call_operand.vmem [shape: f32[32,128], index: 1, kind: input, shape index: {}]
  %s2 = inlined_call_operand.vmem [shape: f32[32,128], index: 2, kind: input, shape index: {}]
  %s3 = inlined_call_operand.vmem [shape: f32[32,128], index: 3, kind: input, shape index: {}]
  %s4 = inlined_call_operand.vmem [shape: f32[1,128], index: 4, kind: input, shape index: {}]
  %s5 = inlined_call_operand.hbm [shape: f32[2,64], index: 5, kind: output, shape index: {}]
  %s6 = sld [smem:[#allocation0]]
  $region30: #{recurrent_layer_forward.1} parent=0
    _
  %s8 = ssub.s32 1, %s6
  %s9 = scalar_select 0, %s8, %s6
  $region1: #{recurrent_layer_forward.1} parent=0
    #allocation4 [shape = 'u8[1024]{0}', space=vmem, size = 0x400, scoped, tag = 'output window, operand 0, single buffered']
    #allocation5 [shape = 's32[1]{0}', space=sflag, size = 0x4, scoped, tag = 'scoped memory for recurrent_layer_forward.1']
    %10 = vsyncpa [#allocation5], 0
    // Predicated region
    $region2: #{recurrent_layer_forward.1} parent=1 // pred_check
      _
    $region3: #{recurrent_layer_forward.1} parent=1 // pred_check_branch
      %12 = sbr.rel (0) target = $region5
    $region4: #{recurrent_layer_forward.1} parent=1 // pred_region
      _
    $region5: #{recurrent_layer_forward.1} parent=1 // pred_fallthru
      _
    // Predicated region
    $region6: #{recurrent_layer_forward.1} parent=1 // pred_check
      _
    $region7: #{recurrent_layer_forward.1} parent=1 // pred_check_branch
      %14 = sbr.rel (0) target = $region9
    $region8: #{recurrent_layer_forward.1} parent=1 // pred_region
      _
    $region9: #{recurrent_layer_forward.1} parent=1 // pred_fallthru
      _
    // Predicated region
    $region10: #{recurrent_layer_forward.1} parent=1 // pred_check
      _
    $region11: #{recurrent_layer_forward.1} parent=1 // pred_check_branch
      %16 = sbr.rel (0) target = $region13
    $region12: #{recurrent_layer_forward.1} parent=1 // pred_region
      _
    $region13: #{recurrent_layer_forward.1} parent=1 // pred_fallthru
      _
    // Predicated region
    $region14: #{recurrent_layer_forward.1} parent=1 // pred_check
      _
    $region15: #{recurrent_layer_forward.1} parent=1 // pred_check_branch
      %18 = sbr.rel (0) target = $region17
    $region16: #{recurrent_layer_forward.1} parent=1 // pred_region
      _
    $region17: #{recurrent_layer_forward.1} parent=1 // pred_fallthru
      _
    // Predicated region
    $region18: #{recurrent_layer_forward.1} parent=1 // pred_check
      _
    $region19: #{recurrent_layer_forward.1} parent=1 // pred_check_branch
      %20 = sbr.rel (0) target = $region21
    $region20: #{recurrent_layer_forward.1} parent=1 // pred_region
      _
    $region21: #{recurrent_layer_forward.1} parent=1 // pred_fallthru
      _
    %v21 = vld [vmem:[%s0] sm:$0xff]
    %v22 = vld [vmem:[%s0 + $0x8] sm:$0xff]
    %23 = vst [vmem:[#allocation3] sm:$0xff] %v21
    %24 = vst [vmem:[#allocation3 + $0x8] sm:$0xff] %v22
    %v25 = vld [vmem:[%s1] sm:$0xff]
    %v26 = vld [vmem:[%s1 + $0x8] sm:$0xff]
    %v27 = vld [vmem:[%s1 + $0x10] sm:$0xff]
    %v28 = vld [vmem:[%s1 + $0x18] sm:$0xff]
    %v29 = vld [vmem:[#allocation3] sm:$0x3]
    %vm30 = vcmask 261120
    %v32 = vsel %vm30, 0.0, 0
    %34 = vmatpush.msra.mxu0 0.0
    %35 = vmatpush.msra.mxu0 0.0
    %36 = vmatpush.msra.mxu0 0.0
    %37 = vmatpush.msra.mxu0 0.0
    %38 = vmatpush.msra.mxu0 0.0
    %39 = vmatpush.msra.mxu0 0.0
    %40 = vmatpush.msra.mxu0 0.0
    %41 = vmatpush.msra.mxu0 0.0
    %42 = vmatpush.msra.mxu0 0.0
    %43 = vmatpush.msra.mxu0 0.0
    %44 = vmatpush.msra.mxu0 0.0
    %45 = vmatpush.msra.mxu0 0.0
    %46 = vmatpush.msra.mxu0 %v28
    %47 = vmatpush.msra.mxu0 %v27
    %48 = vmatpush.msra.mxu0 %v26
    %49 = vmatpush.msra.mxu0 %v25
    %50 = vmatmul.f32.gmra.mxu0 %v32
    %v51 = vpop.f32.mrf.mxu0
    %v52 = vadd.f32 0.0, %v51
    %53 = vdwg.mxu0
    %v54 = vadd.f32 %v29, %v52
    %v55 = vxor.u32 %v54, 2147483648
    %v56 = vmul.f32 %v55, 1.442695
    %v57 = vpow.pop %v56
    %v58 = vadd.f32 %v57, 1.0
    %v59 = vrcp.pop %v58
    %v60 = vmul.f32 %v58, %v59
    %v61 = vsub.f32 1.0, %v60
    %v62 = vmul.f32 %v59, %v61
    %v63 = vadd.f32 %v59, %v62
    %vm64 = vweird.f32 %v58
    %vm65 = vweird.f32 %v59
    %vm66 = vmor %vm64, %vm65
    %v67 = vsel %vm66, %v59, %v63
    %v68 = vand.u32 2147483647, %v58
    %vm69 = vcmp.eq.f32.partialorder %v68, 8.507059e+37
    %v70 = vand.u32 %v58, 2147483648
    %v71 = vor.u32 1.1754944e-38, %v70
    %v72 = vsel %vm69, %v71, %v67
    %v73 = vmul.f32 1.0, %v72
    %v74 = vtanh.pop %v54
    %v75 = vmul.f32 %v73, 0.0
    %77 = vrot.lane.b32.xlu0 %v74, 64
    %v78 = vpop.permute.xlu0 %77
    %v80 = vmul.f32 %v73, %v78
    %82 = vrot.lane.b32.xlu0 %v80, 32
    %v83 = vpop.permute.xlu0 %82
    %v85 = vadd.f32 %v75, %v83
    %v86 = vtanh.pop %v85
    %88 = vrot.lane.b32.xlu0 %v86, 64
    %v89 = vpop.permute.xlu0 %88
    %v91 = vmul.f32 %v73, %v89
    %93 = vrot.lane.b32.xlu0 %v91, 32
    %v94 = vpop.permute.xlu0 %93
    %vm96 = vcmask 254976
    %97 = vst.msk [vmem:[#allocation2] sm:$0x3] %vm96, %v94
    %v98 = vld [vmem:[#allocation3 + $0x2] sm:$0x3]
    %v99 = vsel %vm30, %v94, 0
    %101 = vmatpush.msra.mxu0 0.0
    %102 = vmatpush.msra.mxu0 0.0
    %103 = vmatpush.msra.mxu0 0.0
    %104 = vmatpush.msra.mxu0 0.0
    %105 = vmatpush.msra.mxu0 0.0
    %106 = vmatpush.msra.mxu0 0.0
    %107 = vmatpush.msra.mxu0 0.0
    %108 = vmatpush.msra.mxu0 0.0
    %109 = vmatpush.msra.mxu0 0.0
    %110 = vmatpush.msra.mxu0 0.0
    %111 = vmatpush.msra.mxu0 0.0
    %112 = vmatpush.msra.mxu0 0.0
    %113 = vmatpush.msra.mxu0 %v28
    %114 = vmatpush.msra.mxu0 %v27
    %115 = vmatpush.msra.mxu0 %v26
    %116 = vmatpush.msra.mxu0 %v25
    %117 = vmatmul.f32.gmra.mxu0 %v99
    %v118 = vpop.f32.mrf.mxu0
    %v119 = vadd.f32 0.0, %v118
    %120 = vdwg.mxu0
    %v121 = vadd.f32 %v98, %v119
    %v122 = vxor.u32 %v121, 2147483648
    %v123 = vmul.f32 %v122, 1.442695
    %v124 = vpow.pop %v123
    %v125 = vadd.f32 %v124, 1.0
    %v126 = vrcp.pop %v125
    %v127 = vmul.f32 %v125, %v126
    %v128 = vsub.f32 1.0, %v127
    %v129 = vmul.f32 %v126, %v128
    %v130 = vadd.f32 %v126, %v129
    %vm131 = vweird.f32 %v125
    %vm132 = vweird.f32 %v126
    %vm133 = vmor %vm131, %vm132
    %v134 = vsel %vm133, %v126, %v130
    %v135 = vand.u32 2147483647, %v125
    %vm136 = vcmp.eq.f32.partialorder %v135, 8.507059e+37
    %v137 = vand.u32 %v125, 2147483648
    %v138 = vor.u32 1.1754944e-38, %v137
    %v139 = vsel %vm136, %v138, %v134
    %v140 = vmul.f32 1.0, %v139
    %v141 = vtanh.pop %v121
    %v142 = vmul.f32 %v140, %v85
    %144 = vrot.lane.b32.xlu0 %v141, 64
    %v145 = vpop.permute.xlu0 %144
    %v147 = vmul.f32 %v140, %v145
    %149 = vrot.lane.b32.xlu0 %v147, 32
    %v150 = vpop.permute.xlu0 %149
    %v152 = vadd.f32 %v142, %v150
    %v153 = vtanh.pop %v152
    %155 = vrot.lane.b32.xlu0 %v153, 64
    %v156 = vpop.permute.xlu0 %155
    %v158 = vmul.f32 %v140, %v156
    %160 = vrot.lane.b32.xlu0 %v158, 32
    %v161 = vpop.permute.xlu0 %160
    %163 = vst.msk [vmem:[#allocation2 + $0x2] sm:$0x3] %vm96, %v161
    %v164 = vld [vmem:[#allocation3 + $0x4] sm:$0x3]
    %v165 = vsel %vm30, %v161, 0
    %167 = vmatpush.msra.mxu0 0.0
    %168 = vmatpush.msra.mxu0 0.0
    %169 = vmatpush.msra.mxu0 0.0
    %170 = vmatpush.msra.mxu0 0.0
    %171 = vmatpush.msra.mxu0 0.0
    %172 = vmatpush.msra.mxu0 0.0
    %173 = vmatpush.msra.mxu0 0.0
    %174 = vmatpush.msra.mxu0 0.0
    %175 = vmatpush.msra.mxu0 0.0
    %176 = vmatpush.msra.mxu0 0.0
    %177 = vmatpush.msra.mxu0 0.0
    %178 = vmatpush.msra.mxu0 0.0
    %179 = vmatpush.msra.mxu0 %v28
    %180 = vmatpush.msra.mxu0 %v27
    %181 = vmatpush.msra.mxu0 %v26
    %182 = vmatpush.msra.mxu0 %v25
    %183 = vmatmul.f32.gmra.mxu0 %v165
    %v184 = vpop.f32.mrf.mxu0
    %v185 = vadd.f32 0.0, %v184
    %186 = vdwg.mxu0
    %v187 = vadd.f32 %v164, %v185
    %v188 = vxor.u32 %v187, 2147483648
    %v189 = vmul.f32 %v188, 1.442695
    %v190 = vpow.pop %v189
    %v191 = vadd.f32 %v190, 1.0
    %v192 = vrcp.pop %v191
    %v193 = vmul.f32 %v191, %v192
    %v194 = vsub.f32 1.0, %v193
    %v195 = vmul.f32 %v192, %v194
    %v196 = vadd.f32 %v192, %v195
    %vm197 = vweird.f32 %v191
    %vm198 = vweird.f32 %v192
    %vm199 = vmor %vm197, %vm198
    %v200 = vsel %vm199, %v192, %v196
    %v201 = vand.u32 2147483647, %v191
    %vm202 = vcmp.eq.f32.partialorder %v201, 8.507059e+37
    %v203 = vand.u32 %v191, 2147483648
    %v204 = vor.u32 1.1754944e-38, %v203
    %v205 = vsel %vm202, %v204, %v200
    %v206 = vmul.f32 1.0, %v205
    %v207 = vtanh.pop %v187
    %v208 = vmul.f32 %v206, %v152
    %210 = vrot.lane.b32.xlu0 %v207, 64
    %v211 = vpop.permute.xlu0 %210
    %v213 = vmul.f32 %v206, %v211
    %215 = vrot.lane.b32.xlu0 %v213, 32
    %v216 = vpop.permute.xlu0 %215
    %v218 = vadd.f32 %v208, %v216
    %v219 = vtanh.pop %v218
    %221 = vrot.lane.b32.xlu0 %v219, 64
    %v222 = vpop.permute.xlu0 %221
    %v224 = vmul.f32 %v206, %v222
    %226 = vrot.lane.b32.xlu0 %v224, 32
    %v227 = vpop.permute.xlu0 %226
    %229 = vst.msk [vmem:[#allocation2 + $0x4] sm:$0x3] %vm96, %v227
    %v230 = vld [vmem:[#allocation3 + $0x6] sm:$0x3]
    %v231 = vsel %vm30, %v227, 0
    %233 = vmatpush.msra.mxu0 0.0
    %234 = vmatpush.msra.mxu0 0.0
    %235 = vmatpush.msra.mxu0 0.0
    %236 = vmatpush.msra.mxu0 0.0
    %237 = vmatpush.msra.mxu0 0.0
    %238 = vmatpush.msra.mxu0 0.0
    %239 = vmatpush.msra.mxu0 0.0
    %240 = vmatpush.msra.mxu0 0.0
    %241 = vmatpush.msra.mxu0 0.0
    %242 = vmatpush.msra.mxu0 0.0
    %243 = vmatpush.msra.mxu0 0.0
    %244 = vmatpush.msra.mxu0 0.0
    %245 = vmatpush.msra.mxu0 %v28
    %246 = vmatpush.msra.mxu0 %v27
    %247 = vmatpush.msra.mxu0 %v26
    %248 = vmatpush.msra.mxu0 %v25
    %249 = vmatmul.f32.gmra.mxu0 %v231
    %v250 = vpop.f32.mrf.mxu0
    %v251 = vadd.f32 0.0, %v250
    %252 = vdwg.mxu0
    %v253 = vadd.f32 %v230, %v251
    %v254 = vxor.u32 %v253, 2147483648
    %v255 = vmul.f32 %v254, 1.442695
    %v256 = vpow.pop %v255
    %v257 = vadd.f32 %v256, 1.0
    %v258 = vrcp.pop %v257
    %v259 = vmul.f32 %v257, %v258
    %v260 = vsub.f32 1.0, %v259
    %v261 = vmul.f32 %v258, %v260
    %v262 = vadd.f32 %v258, %v261
    %vm263 = vweird.f32 %v257
    %vm264 = vweird.f32 %v258
    %vm265 = vmor %vm263, %vm264
    %v266 = vsel %vm265, %v258, %v262
    %v267 = vand.u32 2147483647, %v257
    %vm268 = vcmp.eq.f32.partialorder %v267, 8.507059e+37
    %v269 = vand.u32 %v257, 2147483648
    %v270 = vor.u32 1.1754944e-38, %v269
    %v271 = vsel %vm268, %v270, %v266
    %v272 = vmul.f32 1.0, %v271
    %v273 = vtanh.pop %v253
    %v274 = vmul.f32 %v272, %v218
    %276 = vrot.lane.b32.xlu0 %v273, 64
    %v277 = vpop.permute.xlu0 %276
    %v279 = vmul.f32 %v272, %v277
    %281 = vrot.lane.b32.xlu0 %v279, 32
    %v282 = vpop.permute.xlu0 %281
    %v284 = vadd.f32 %v274, %v282
    %v285 = vtanh.pop %v284
    %287 = vrot.lane.b32.xlu0 %v285, 64
    %v288 = vpop.permute.xlu0 %287
    %v290 = vmul.f32 %v272, %v288
    %292 = vrot.lane.b32.xlu0 %v290, 32
    %v293 = vpop.permute.xlu0 %292
    %295 = vst.msk [vmem:[#allocation2 + $0x6] sm:$0x3] %vm96, %v293
    %v296 = vld [vmem:[#allocation3 + $0x8] sm:$0x3]
    %v297 = vsel %vm30, %v293, 0
    %299 = vmatpush.msra.mxu0 0.0
    %300 = vmatpush.msra.mxu0 0.0
    %301 = vmatpush.msra.mxu0 0.0
    %302 = vmatpush.msra.mxu0 0.0
    %303 = vmatpush.msra.mxu0 0.0
    %304 = vmatpush.msra.mxu0 0.0
    %305 = vmatpush.msra.mxu0 0.0
    %306 = vmatpush.msra.mxu0 0.0
    %307 = vmatpush.msra.mxu0 0.0
    %308 = vmatpush.msra.mxu0 0.0
    %309 = vmatpush.msra.mxu0 0.0
    %310 = vmatpush.msra.mxu0 0.0
    %311 = vmatpush.msra.mxu0 %v28
    %312 = vmatpush.msra.mxu0 %v27
    %313 = vmatpush.msra.mxu0 %v26
    %314 = vmatpush.msra.mxu0 %v25
    %315 = vmatmul.f32.gmra.mxu0 %v297
    %v316 = vpop.f32.mrf.mxu0
    %v317 = vadd.f32 0.0, %v316
    %318 = vdwg.mxu0
    %v319 = vadd.f32 %v296, %v317
    %v320 = vxor.u32 %v319, 2147483648
    %v321 = vmul.f32 %v320, 1.442695
    %v322 = vpow.pop %v321
    %v323 = vadd.f32 %v322, 1.0
    %v324 = vrcp.pop %v323
    %v325 = vmul.f32 %v323, %v324
    %v326 = vsub.f32 1.0, %v325
    %v327 = vmul.f32 %v324, %v326
    %v328 = vadd.f32 %v324, %v327
    %vm329 = vweird.f32 %v323
    %vm330 = vweird.f32 %v324
    %vm331 = vmor %vm329, %vm330
    %v332 = vsel %vm331, %v324, %v328
    %v333 = vand.u32 2147483647, %v323
    %vm334 = vcmp.eq.f32.partialorder %v333, 8.507059e+37
    %v335 = vand.u32 %v323, 2147483648
    %v336 = vor.u32 1.1754944e-38, %v335
    %v337 = vsel %vm334, %v336, %v332
    %v338 = vmul.f32 1.0, %v337
    %v339 = vtanh.pop %v319
    %v340 = vmul.f32 %v338, %v284
    %342 = vrot.lane.b32.xlu0 %v339, 64
    %v343 = vpop.permute.xlu0 %342
    %v345 = vmul.f32 %v338, %v343
    %347 = vrot.lane.b32.xlu0 %v345, 32
    %v348 = vpop.permute.xlu0 %347
    %v350 = vadd.f32 %v340, %v348
    %v351 = vtanh.pop %v350
    %353 = vrot.lane.b32.xlu0 %v351, 64
    %v354 = vpop.permute.xlu0 %353
    %v356 = vmul.f32 %v338, %v354
    %358 = vrot.lane.b32.xlu0 %v356, 32
    %v359 = vpop.permute.xlu0 %358
    %361 = vst.msk [vmem:[#allocation2 + $0x8] sm:$0x3] %vm96, %v359
    %v362 = vld [vmem:[#allocation3 + $0xa] sm:$0x3]
    %v363 = vsel %vm30, %v359, 0
    %365 = vmatpush.msra.mxu0 0.0
    %366 = vmatpush.msra.mxu0 0.0
    %367 = vmatpush.msra.mxu0 0.0
    %368 = vmatpush.msra.mxu0 0.0
    %369 = vmatpush.msra.mxu0 0.0
    %370 = vmatpush.msra.mxu0 0.0
    %371 = vmatpush.msra.mxu0 0.0
    %372 = vmatpush.msra.mxu0 0.0
    %373 = vmatpush.msra.mxu0 0.0
    %374 = vmatpush.msra.mxu0 0.0
    %375 = vmatpush.msra.mxu0 0.0
    %376 = vmatpush.msra.mxu0 0.0
    %377 = vmatpush.msra.mxu0 %v28
    %378 = vmatpush.msra.mxu0 %v27
    %379 = vmatpush.msra.mxu0 %v26
    %380 = vmatpush.msra.mxu0 %v25
    %381 = vmatmul.f32.gmra.mxu0 %v363
    %v382 = vpop.f32.mrf.mxu0
    %v383 = vadd.f32 0.0, %v382
    %384 = vdwg.mxu0
    %v385 = vadd.f32 %v362, %v383
    %v386 = vxor.u32 %v385, 2147483648
    %v387 = vmul.f32 %v386, 1.442695
    %v388 = vpow.pop %v387
    %v389 = vadd.f32 %v388, 1.0
    %v390 = vrcp.pop %v389
    %v391 = vmul.f32 %v389, %v390
    %v392 = vsub.f32 1.0, %v391
    %v393 = vmul.f32 %v390, %v392
    %v394 = vadd.f32 %v390, %v393
    %vm395 = vweird.f32 %v389
    %vm396 = vweird.f32 %v390
    %vm397 = vmor %vm395, %vm396
    %v398 = vsel %vm397, %v390, %v394
    %v399 = vand.u32 2147483647, %v389
    %vm400 = vcmp.eq.f32.partialorder %v399, 8.507059e+37
    %v401 = vand.u32 %v389, 2147483648
    %v402 = vor.u32 1.1754944e-38, %v401
    %v403 = vsel %vm400, %v402, %v398
    %v404 = vmul.f32 1.0, %v403
    %v405 = vtanh.pop %v385
    %v406 = vmul.f32 %v404, %v350
    %408 = vrot.lane.b32.xlu0 %v405, 64
    %v409 = vpop.permute.xlu0 %408
    %v411 = vmul.f32 %v404, %v409
    %413 = vrot.lane.b32.xlu0 %v411, 32
    %v414 = vpop.permute.xlu0 %413
    %v416 = vadd.f32 %v406, %v414
    %v417 = vtanh.pop %v416
    %419 = vrot.lane.b32.xlu0 %v417, 64
    %v420 = vpop.permute.xlu0 %419
    %v422 = vmul.f32 %v404, %v420
    %424 = vrot.lane.b32.xlu0 %v422, 32
    %v425 = vpop.permute.xlu0 %424
    %427 = vst.msk [vmem:[#allocation2 + $0xa] sm:$0x3] %vm96, %v425
    %v428 = vld [vmem:[#allocation3 + $0xc] sm:$0x3]
    %v429 = vsel %vm30, %v425, 0
    %431 = vmatpush.msra.mxu0 0.0
    %432 = vmatpush.msra.mxu0 0.0
    %433 = vmatpush.msra.mxu0 0.0
    %434 = vmatpush.msra.mxu0 0.0
    %435 = vmatpush.msra.mxu0 0.0
    %436 = vmatpush.msra.mxu0 0.0
    %437 = vmatpush.msra.mxu0 0.0
    %438 = vmatpush.msra.mxu0 0.0
    %439 = vmatpush.msra.mxu0 0.0
    %440 = vmatpush.msra.mxu0 0.0
    %441 = vmatpush.msra.mxu0 0.0
    %442 = vmatpush.msra.mxu0 0.0
    %443 = vmatpush.msra.mxu0 %v28
    %444 = vmatpush.msra.mxu0 %v27
    %445 = vmatpush.msra.mxu0 %v26
    %446 = vmatpush.msra.mxu0 %v25
    %447 = vmatmul.f32.gmra.mxu0 %v429
    %v448 = vpop.f32.mrf.mxu0
    %v449 = vadd.f32 0.0, %v448
    %450 = vdwg.mxu0
    %v451 = vadd.f32 %v428, %v449
    %v452 = vxor.u32 %v451, 2147483648
    %v453 = vmul.f32 %v452, 1.442695
    %v454 = vpow.pop %v453
    %v455 = vadd.f32 %v454, 1.0
    %v456 = vrcp.pop %v455
    %v457 = vmul.f32 %v455, %v456
    %v458 = vsub.f32 1.0, %v457
    %v459 = vmul.f32 %v456, %v458
    %v460 = vadd.f32 %v456, %v459
    %vm461 = vweird.f32 %v455
    %vm462 = vweird.f32 %v456
    %vm463 = vmor %vm461, %vm462
    %v464 = vsel %vm463, %v456, %v460
    %v465 = vand.u32 2147483647, %v455
    %vm466 = vcmp.eq.f32.partialorder %v465, 8.507059e+37
    %v467 = vand.u32 %v455, 2147483648
    %v468 = vor.u32 1.1754944e-38, %v467
    %v469 = vsel %vm466, %v468, %v464
    %v470 = vmul.f32 1.0, %v469
    %v471 = vtanh.pop %v451
    %v472 = vmul.f32 %v470, %v416
    %474 = vrot.lane.b32.xlu0 %v471, 64
    %v475 = vpop.permute.xlu0 %474
    %v477 = vmul.f32 %v470, %v475
    %479 = vrot.lane.b32.xlu0 %v477, 32
    %v480 = vpop.permute.xlu0 %479
    %v482 = vadd.f32 %v472, %v480
    %v483 = vtanh.pop %v482
    %485 = vrot.lane.b32.xlu0 %v483, 64
    %v486 = vpop.permute.xlu0 %485
    %v488 = vmul.f32 %v470, %v486
    %490 = vrot.lane.b32.xlu0 %v488, 32
    %v491 = vpop.permute.xlu0 %490
    %493 = vst.msk [vmem:[#allocation2 + $0xc] sm:$0x3] %vm96, %v491
    %v494 = vld [vmem:[#allocation3 + $0xe] sm:$0x3]
    %v495 = vsel %vm30, %v491, 0
    %497 = vmatpush.msra.mxu0 0.0
    %498 = vmatpush.msra.mxu0 0.0
    %499 = vmatpush.msra.mxu0 0.0
    %500 = vmatpush.msra.mxu0 0.0
    %501 = vmatpush.msra.mxu0 0.0
    %502 = vmatpush.msra.mxu0 0.0
    %503 = vmatpush.msra.mxu0 0.0
    %504 = vmatpush.msra.mxu0 0.0
    %505 = vmatpush.msra.mxu0 0.0
    %506 = vmatpush.msra.mxu0 0.0
    %507 = vmatpush.msra.mxu0 0.0
    %508 = vmatpush.msra.mxu0 0.0
    %509 = vmatpush.msra.mxu0 %v28
    %510 = vmatpush.msra.mxu0 %v27
    %511 = vmatpush.msra.mxu0 %v26
    %512 = vmatpush.msra.mxu0 %v25
    %513 = vmatmul.f32.gmra.mxu0 %v495
    %v514 = vpop.f32.mrf.mxu0
    %v515 = vadd.f32 0.0, %v514
    %516 = vdwg.mxu0
    %v517 = vadd.f32 %v494, %v515
    %v518 = vxor.u32 %v517, 2147483648
    %v519 = vmul.f32 %v518, 1.442695
    %v520 = vpow.pop %v519
    %v521 = vadd.f32 %v520, 1.0
    %v522 = vrcp.pop %v521
    %v523 = vmul.f32 %v521, %v522
    %v524 = vsub.f32 1.0, %v523
    %v525 = vmul.f32 %v522, %v524
    %v526 = vadd.f32 %v522, %v525
    %vm527 = vweird.f32 %v521
    %vm528 = vweird.f32 %v522
    %vm529 = vmor %vm527, %vm528
    %v530 = vsel %vm529, %v522, %v526
    %v531 = vand.u32 2147483647, %v521
    %vm532 = vcmp.eq.f32.partialorder %v531, 8.507059e+37
    %v533 = vand.u32 %v521, 2147483648
    %v534 = vor.u32 1.1754944e-38, %v533
    %v535 = vsel %vm532, %v534, %v530
    %v536 = vmul.f32 1.0, %v535
    %v537 = vtanh.pop %v517
    %v538 = vmul.f32 %v536, %v482
    %540 = vrot.lane.b32.xlu0 %v537, 64
    %v541 = vpop.permute.xlu0 %540
    %v543 = vmul.f32 %v536, %v541
    %545 = vrot.lane.b32.xlu0 %v543, 32
    %v546 = vpop.permute.xlu0 %545
    %v548 = vadd.f32 %v538, %v546
    %v549 = vtanh.pop %v548
    %551 = vrot.lane.b32.xlu0 %v549, 64
    %v552 = vpop.permute.xlu0 %551
    %v554 = vmul.f32 %v536, %v552
    %556 = vrot.lane.b32.xlu0 %v554, 32
    %v557 = vpop.permute.xlu0 %556
    %559 = vst.msk [vmem:[#allocation2 + $0xe] sm:$0x3] %vm96, %v557
    %v560 = vld [vmem:[#allocation2] sm:$0xff]
    %v561 = vld [vmem:[#allocation2 + $0x8] sm:$0xff]
    %v562 = vld [vmem:[%s2] sm:$0xff]
    %v563 = vld [vmem:[%s2 + $0x8] sm:$0xff]
    %v564 = vld [vmem:[%s2 + $0x10] sm:$0xff]
    %v565 = vld [vmem:[%s2 + $0x18] sm:$0xff]
    %v566 = vld [vmem:[%s4] sm:$0x1]
    %v568 = vperm.slane %v566, 0
    %v571 = vsel %vm30, %v560, 0
    %v574 = vsel %vm30, %v561, 0
    %576 = vmatpush.msra.mxu0 0.0
    %577 = vmatpush.msra.mxu0 0.0
    %578 = vmatpush.msra.mxu0 0.0
    %579 = vmatpush.msra.mxu0 0.0
    %580 = vmatpush.msra.mxu0 0.0
    %581 = vmatpush.msra.mxu0 0.0
    %582 = vmatpush.msra.mxu0 0.0
    %583 = vmatpush.msra.mxu0 0.0
    %584 = vmatpush.msra.mxu0 0.0
    %585 = vmatpush.msra.mxu0 0.0
    %586 = vmatpush.msra.mxu0 0.0
    %587 = vmatpush.msra.mxu0 0.0
    %588 = vmatpush.msra.mxu0 %v565
    %589 = vmatpush.msra.mxu0 %v564
    %590 = vmatpush.msra.mxu0 %v563
    %591 = vmatpush.msra.mxu0 %v562
    %592 = vmatmul.f32.gmra.mxu0 %v571
    %v593 = vpop.f32.mrf.mxu0
    %v594 = vadd.f32 %v568, %v593
    %595 = vmatmul.f32.gmra.mxu0 %v574
    %v596 = vpop.f32.mrf.mxu0
    %v597 = vadd.f32 %v568, %v596
    %598 = vdwg.mxu0
    %599 = vst [vmem:[#allocation3] sm:$0xff] %v594
    %600 = vst [vmem:[#allocation3 + $0x8] sm:$0xff] %v597
    %v601 = vld [vmem:[%s3] sm:$0xff]
    %v602 = vld [vmem:[%s3 + $0x8] sm:$0xff]
    %v603 = vld [vmem:[%s3 + $0x10] sm:$0xff]
    %v604 = vld [vmem:[%s3 + $0x18] sm:$0xff]
    %v605 = vld [vmem:[#allocation3] sm:$0x3]
    %606 = vmatpush.msra.mxu0 0.0
    %607 = vmatpush.msra.mxu0 0.0
    %608 = vmatpush.msra.mxu0 0.0
    %609 = vmatpush.msra.mxu0 0.0
    %610 = vmatpush.msra.mxu0 0.0
    %611 = vmatpush.msra.mxu0 0.0
    %612 = vmatpush.msra.mxu0 0.0
    %613 = vmatpush.msra.mxu0 0.0
    %614 = vmatpush.msra.mxu0 0.0
    %615 = vmatpush.msra.mxu0 0.0
    %616 = vmatpush.msra.mxu0 0.0
    %617 = vmatpush.msra.mxu0 0.0
    %618 = vmatpush.msra.mxu0 %v604
    %619 = vmatpush.msra.mxu0 %v603
    %620 = vmatpush.msra.mxu0 %v602
    %621 = vmatpush.msra.mxu0 %v601
    %622 = vmatmul.f32.gmra.mxu0 %v32
    %v623 = vpop.f32.mrf.mxu0
    %v624 = vadd.f32 0.0, %v623
    %625 = vdwg.mxu0
    %v626 = vadd.f32 %v605, %v624
    %v627 = vxor.u32 %v626, 2147483648
    %v628 = vmul.f32 %v627, 1.442695
    %v629 = vpow.pop %v628
    %v630 = vadd.f32 %v629, 1.0
    %v631 = vrcp.pop %v630
    %v632 = vmul.f32 %v630, %v631
    %v633 = vsub.f32 1.0, %v632
    %v634 = vmul.f32 %v631, %v633
    %v635 = vadd.f32 %v631, %v634
    %vm636 = vweird.f32 %v630
    %vm637 = vweird.f32 %v631
    %vm638 = vmor %vm636, %vm637
    %v639 = vsel %vm638, %v631, %v635
    %v640 = vand.u32 2147483647, %v630
    %vm641 = vcmp.eq.f32.partialorder %v640, 8.507059e+37
    %v642 = vand.u32 %v630, 2147483648
    %v643 = vor.u32 1.1754944e-38, %v642
    %v644 = vsel %vm641, %v643, %v639
    %v645 = vmul.f32 1.0, %v644
    %v646 = vtanh.pop %v626
    %v647 = vmul.f32 %v645, 0.0
    %649 = vrot.lane.b32.xlu0 %v646, 64
    %v650 = vpop.permute.xlu0 %649
    %v652 = vmul.f32 %v645, %v650
    %654 = vrot.lane.b32.xlu0 %v652, 32
    %v655 = vpop.permute.xlu0 %654
    %v657 = vadd.f32 %v647, %v655
    %v658 = vtanh.pop %v657
    %660 = vrot.lane.b32.xlu0 %v658, 64
    %v661 = vpop.permute.xlu0 %660
    %v663 = vmul.f32 %v645, %v661
    %v664 = vld [vmem:[#allocation3 + $0x2] sm:$0x3]
    %666 = vrot.lane.b32.xlu0 %v663, 32
    %v667 = vpop.permute.xlu0 %666
    %v668 = vsel %vm30, %v667, 0
    %670 = vmatpush.msra.mxu0 0.0
    %671 = vmatpush.msra.mxu0 0.0
    %672 = vmatpush.msra.mxu0 0.0
    %673 = vmatpush.msra.mxu0 0.0
    %674 = vmatpush.msra.mxu0 0.0
    %675 = vmatpush.msra.mxu0 0.0
    %676 = vmatpush.msra.mxu0 0.0
    %677 = vmatpush.msra.mxu0 0.0
    %678 = vmatpush.msra.mxu0 0.0
    %679 = vmatpush.msra.mxu0 0.0
    %680 = vmatpush.msra.mxu0 0.0
    %681 = vmatpush.msra.mxu0 0.0
    %682 = vmatpush.msra.mxu0 %v604
    %683 = vmatpush.msra.mxu0 %v603
    %684 = vmatpush.msra.mxu0 %v602
    %685 = vmatpush.msra.mxu0 %v601
    %686 = vmatmul.f32.gmra.mxu0 %v668
    %v687 = vpop.f32.mrf.mxu0
    %v688 = vadd.f32 0.0, %v687
    %689 = vdwg.mxu0
    %v690 = vadd.f32 %v664, %v688
    %v691 = vxor.u32 %v690, 2147483648
    %v692 = vmul.f32 %v691, 1.442695
    %v693 = vpow.pop %v692
    %v694 = vadd.f32 %v693, 1.0
    %v695 = vrcp.pop %v694
    %v696 = vmul.f32 %v694, %v695
    %v697 = vsub.f32 1.0, %v696
    %v698 = vmul.f32 %v695, %v697
    %v699 = vadd.f32 %v695, %v698
    %vm700 = vweird.f32 %v694
    %vm701 = vweird.f32 %v695
    %vm702 = vmor %vm700, %vm701
    %v703 = vsel %vm702, %v695, %v699
    %v704 = vand.u32 2147483647, %v694
    %vm705 = vcmp.eq.f32.partialorder %v704, 8.507059e+37
    %v706 = vand.u32 %v694, 2147483648
    %v707 = vor.u32 1.1754944e-38, %v706
    %v708 = vsel %vm705, %v707, %v703
    %v709 = vmul.f32 1.0, %v708
    %v710 = vtanh.pop %v690
    %v711 = vmul.f32 %v709, %v657
    %713 = vrot.lane.b32.xlu0 %v710, 64
    %v714 = vpop.permute.xlu0 %713
    %v716 = vmul.f32 %v709, %v714
    %718 = vrot.lane.b32.xlu0 %v716, 32
    %v719 = vpop.permute.xlu0 %718
    %v721 = vadd.f32 %v711, %v719
    %v722 = vtanh.pop %v721
    %724 = vrot.lane.b32.xlu0 %v722, 64
    %v725 = vpop.permute.xlu0 %724
    %v727 = vmul.f32 %v709, %v725
    %v728 = vld [vmem:[#allocation3 + $0x4] sm:$0x3]
    %730 = vrot.lane.b32.xlu0 %v727, 32
    %v731 = vpop.permute.xlu0 %730
    %v732 = vsel %vm30, %v731, 0
    %734 = vmatpush.msra.mxu0 0.0
    %735 = vmatpush.msra.mxu0 0.0
    %736 = vmatpush.msra.mxu0 0.0
    %737 = vmatpush.msra.mxu0 0.0
    %738 = vmatpush.msra.mxu0 0.0
    %739 = vmatpush.msra.mxu0 0.0
    %740 = vmatpush.msra.mxu0 0.0
    %741 = vmatpush.msra.mxu0 0.0
    %742 = vmatpush.msra.mxu0 0.0
    %743 = vmatpush.msra.mxu0 0.0
    %744 = vmatpush.msra.mxu0 0.0
    %745 = vmatpush.msra.mxu0 0.0
    %746 = vmatpush.msra.mxu0 %v604
    %747 = vmatpush.msra.mxu0 %v603
    %748 = vmatpush.msra.mxu0 %v602
    %749 = vmatpush.msra.mxu0 %v601
    %750 = vmatmul.f32.gmra.mxu0 %v732
    %v751 = vpop.f32.mrf.mxu0
    %v752 = vadd.f32 0.0, %v751
    %753 = vdwg.mxu0
    %v754 = vadd.f32 %v728, %v752
    %v755 = vxor.u32 %v754, 2147483648
    %v756 = vmul.f32 %v755, 1.442695
    %v757 = vpow.pop %v756
    %v758 = vadd.f32 %v757, 1.0
    %v759 = vrcp.pop %v758
    %v760 = vmul.f32 %v758, %v759
    %v761 = vsub.f32 1.0, %v760
    %v762 = vmul.f32 %v759, %v761
    %v763 = vadd.f32 %v759, %v762
    %vm764 = vweird.f32 %v758
    %vm765 = vweird.f32 %v759
    %vm766 = vmor %vm764, %vm765
    %v767 = vsel %vm766, %v759, %v763
    %v768 = vand.u32 2147483647, %v758
    %vm769 = vcmp.eq.f32.partialorder %v768, 8.507059e+37
    %v770 = vand.u32 %v758, 2147483648
    %v771 = vor.u32 1.1754944e-38, %v770
    %v772 = vsel %vm769, %v771, %v767
    %v773 = vmul.f32 1.0, %v772
    %v774 = vtanh.pop %v754
    %v775 = vmul.f32 %v773, %v721
    %777 = vrot.lane.b32.xlu0 %v774, 64
    %v778 = vpop.permute.xlu0 %777
    %v780 = vmul.f32 %v773, %v778
    %782 = vrot.lane.b32.xlu0 %v780, 32
    %v783 = vpop.permute.xlu0 %782
    %v785 = vadd.f32 %v775, %v783
    %v786 = vtanh.pop %v785
    %788 = vrot.lane.b32.xlu0 %v786, 64
    %v789 = vpop.permute.xlu0 %788
    %v791 = vmul.f32 %v773, %v789
    %v792 = vld [vmem:[#allocation3 + $0x6] sm:$0x3]
    %794 = vrot.lane.b32.xlu0 %v791, 32
    %v795 = vpop.permute.xlu0 %794
    %v796 = vsel %vm30, %v795, 0
    %798 = vmatpush.msra.mxu0 0.0
    %799 = vmatpush.msra.mxu0 0.0
    %800 = vmatpush.msra.mxu0 0.0
    %801 = vmatpush.msra.mxu0 0.0
    %802 = vmatpush.msra.mxu0 0.0
    %803 = vmatpush.msra.mxu0 0.0
    %804 = vmatpush.msra.mxu0 0.0
    %805 = vmatpush.msra.mxu0 0.0
    %806 = vmatpush.msra.mxu0 0.0
    %807 = vmatpush.msra.mxu0 0.0
    %808 = vmatpush.msra.mxu0 0.0
    %809 = vmatpush.msra.mxu0 0.0
    %810 = vmatpush.msra.mxu0 %v604
    %811 = vmatpush.msra.mxu0 %v603
    %812 = vmatpush.msra.mxu0 %v602
    %813 = vmatpush.msra.mxu0 %v601
    %814 = vmatmul.f32.gmra.mxu0 %v796
    %v815 = vpop.f32.mrf.mxu0
    %v816 = vadd.f32 0.0, %v815
    %817 = vdwg.mxu0
    %v818 = vadd.f32 %v792, %v816
    %v819 = vxor.u32 %v818, 2147483648
    %v820 = vmul.f32 %v819, 1.442695
    %v821 = vpow.pop %v820
    %v822 = vadd.f32 %v821, 1.0
    %v823 = vrcp.pop %v822
    %v824 = vmul.f32 %v822, %v823
    %v825 = vsub.f32 1.0, %v824
    %v826 = vmul.f32 %v823, %v825
    %v827 = vadd.f32 %v823, %v826
    %vm828 = vweird.f32 %v822
    %vm829 = vweird.f32 %v823
    %vm830 = vmor %vm828, %vm829
    %v831 = vsel %vm830, %v823, %v827
    %v832 = vand.u32 2147483647, %v822
    %vm833 = vcmp.eq.f32.partialorder %v832, 8.507059e+37
    %v834 = vand.u32 %v822, 2147483648
    %v835 = vor.u32 1.1754944e-38, %v834
    %v836 = vsel %vm833, %v835, %v831
    %v837 = vmul.f32 1.0, %v836
    %v838 = vtanh.pop %v818
    %v839 = vmul.f32 %v837, %v785
    %841 = vrot.lane.b32.xlu0 %v838, 64
    %v842 = vpop.permute.xlu0 %841
    %v844 = vmul.f32 %v837, %v842
    %846 = vrot.lane.b32.xlu0 %v844, 32
    %v847 = vpop.permute.xlu0 %846
    %v849 = vadd.f32 %v839, %v847
    %v850 = vtanh.pop %v849
    %852 = vrot.lane.b32.xlu0 %v850, 64
    %v853 = vpop.permute.xlu0 %852
    %v855 = vmul.f32 %v837, %v853
    %v856 = vld [vmem:[#allocation3 + $0x8] sm:$0x3]
    %858 = vrot.lane.b32.xlu0 %v855, 32
    %v859 = vpop.permute.xlu0 %858
    %v860 = vsel %vm30, %v859, 0
    %862 = vmatpush.msra.mxu0 0.0
    %863 = vmatpush.msra.mxu0 0.0
    %864 = vmatpush.msra.mxu0 0.0
    %865 = vmatpush.msra.mxu0 0.0
    %866 = vmatpush.msra.mxu0 0.0
    %867 = vmatpush.msra.mxu0 0.0
    %868 = vmatpush.msra.mxu0 0.0
    %869 = vmatpush.msra.mxu0 0.0
    %870 = vmatpush.msra.mxu0 0.0
    %871 = vmatpush.msra.mxu0 0.0
    %872 = vmatpush.msra.mxu0 0.0
    %873 = vmatpush.msra.mxu0 0.0
    %874 = vmatpush.msra.mxu0 %v604
    %875 = vmatpush.msra.mxu0 %v603
    %876 = vmatpush.msra.mxu0 %v602
    %877 = vmatpush.msra.mxu0 %v601
    %878 = vmatmul.f32.gmra.mxu0 %v860
    %v879 = vpop.f32.mrf.mxu0
    %v880 = vadd.f32 0.0, %v879
    %881 = vdwg.mxu0
    %v882 = vadd.f32 %v856, %v880
    %v883 = vxor.u32 %v882, 2147483648
    %v884 = vmul.f32 %v883, 1.442695
    %v885 = vpow.pop %v884
    %v886 = vadd.f32 %v885, 1.0
    %v887 = vrcp.pop %v886
    %v888 = vmul.f32 %v886, %v887
    %v889 = vsub.f32 1.0, %v888
    %v890 = vmul.f32 %v887, %v889
    %v891 = vadd.f32 %v887, %v890
    %vm892 = vweird.f32 %v886
    %vm893 = vweird.f32 %v887
    %vm894 = vmor %vm892, %vm893
    %v895 = vsel %vm894, %v887, %v891
    %v896 = vand.u32 2147483647, %v886
    %vm897 = vcmp.eq.f32.partialorder %v896, 8.507059e+37
    %v898 = vand.u32 %v886, 2147483648
    %v899 = vor.u32 1.1754944e-38, %v898
    %v900 = vsel %vm897, %v899, %v895
    %v901 = vmul.f32 1.0, %v900
    %v902 = vtanh.pop %v882
    %v903 = vmul.f32 %v901, %v849
    %905 = vrot.lane.b32.xlu0 %v902, 64
    %v906 = vpop.permute.xlu0 %905
    %v908 = vmul.f32 %v901, %v906
    %910 = vrot.lane.b32.xlu0 %v908, 32
    %v911 = vpop.permute.xlu0 %910
    %v913 = vadd.f32 %v903, %v911
    %v914 = vtanh.pop %v913
    %916 = vrot.lane.b32.xlu0 %v914, 64
    %v917 = vpop.permute.xlu0 %916
    %v919 = vmul.f32 %v901, %v917
    %v920 = vld [vmem:[#allocation3 + $0xa] sm:$0x3]
    %922 = vrot.lane.b32.xlu0 %v919, 32
    %v923 = vpop.permute.xlu0 %922
    %v924 = vsel %vm30, %v923, 0
    %926 = vmatpush.msra.mxu0 0.0
    %927 = vmatpush.msra.mxu0 0.0
    %928 = vmatpush.msra.mxu0 0.0
    %929 = vmatpush.msra.mxu0 0.0
    %930 = vmatpush.msra.mxu0 0.0
    %931 = vmatpush.msra.mxu0 0.0
    %932 = vmatpush.msra.mxu0 0.0
    %933 = vmatpush.msra.mxu0 0.0
    %934 = vmatpush.msra.mxu0 0.0
    %935 = vmatpush.msra.mxu0 0.0
    %936 = vmatpush.msra.mxu0 0.0
    %937 = vmatpush.msra.mxu0 0.0
    %938 = vmatpush.msra.mxu0 %v604
    %939 = vmatpush.msra.mxu0 %v603
    %940 = vmatpush.msra.mxu0 %v602
    %941 = vmatpush.msra.mxu0 %v601
    %942 = vmatmul.f32.gmra.mxu0 %v924
    %v943 = vpop.f32.mrf.mxu0
    %v944 = vadd.f32 0.0, %v943
    %945 = vdwg.mxu0
    %v946 = vadd.f32 %v920, %v944
    %v947 = vxor.u32 %v946, 2147483648
    %v948 = vmul.f32 %v947, 1.442695
    %v949 = vpow.pop %v948
    %v950 = vadd.f32 %v949, 1.0
    %v951 = vrcp.pop %v950
    %v952 = vmul.f32 %v950, %v951
    %v953 = vsub.f32 1.0, %v952
    %v954 = vmul.f32 %v951, %v953
    %v955 = vadd.f32 %v951, %v954
    %vm956 = vweird.f32 %v950
    %vm957 = vweird.f32 %v951
    %vm958 = vmor %vm956, %vm957
    %v959 = vsel %vm958, %v951, %v955
    %v960 = vand.u32 2147483647, %v950
    %vm961 = vcmp.eq.f32.partialorder %v960, 8.507059e+37
    %v962 = vand.u32 %v950, 2147483648
    %v963 = vor.u32 1.1754944e-38, %v962
    %v964 = vsel %vm961, %v963, %v959
    %v965 = vmul.f32 1.0, %v964
    %v966 = vtanh.pop %v946
    %v967 = vmul.f32 %v965, %v913
    %969 = vrot.lane.b32.xlu0 %v966, 64
    %v970 = vpop.permute.xlu0 %969
    %v972 = vmul.f32 %v965, %v970
    %974 = vrot.lane.b32.xlu0 %v972, 32
    %v975 = vpop.permute.xlu0 %974
    %v977 = vadd.f32 %v967, %v975
    %v978 = vtanh.pop %v977
    %980 = vrot.lane.b32.xlu0 %v978, 64
    %v981 = vpop.permute.xlu0 %980
    %v983 = vmul.f32 %v965, %v981
    %v984 = vld [vmem:[#allocation3 + $0xc] sm:$0x3]
    %986 = vrot.lane.b32.xlu0 %v983, 32
    %v987 = vpop.permute.xlu0 %986
    %v988 = vsel %vm30, %v987, 0
    %990 = vmatpush.msra.mxu0 0.0
    %991 = vmatpush.msra.mxu0 0.0
    %992 = vmatpush.msra.mxu0 0.0
    %993 = vmatpush.msra.mxu0 0.0
    %994 = vmatpush.msra.mxu0 0.0
    %995 = vmatpush.msra.mxu0 0.0
    %996 = vmatpush.msra.mxu0 0.0
    %997 = vmatpush.msra.mxu0 0.0
    %998 = vmatpush.msra.mxu0 0.0
    %999 = vmatpush.msra.mxu0 0.0
    %1000 = vmatpush.msra.mxu0 0.0
    %1001 = vmatpush.msra.mxu0 0.0
    %1002 = vmatpush.msra.mxu0 %v604
    %1003 = vmatpush.msra.mxu0 %v603
    %1004 = vmatpush.msra.mxu0 %v602
    %1005 = vmatpush.msra.mxu0 %v601
    %1006 = vmatmul.f32.gmra.mxu0 %v988
    %v1007 = vpop.f32.mrf.mxu0
    %v1008 = vadd.f32 0.0, %v1007
    %1009 = vdwg.mxu0
    %v1010 = vadd.f32 %v984, %v1008
    %v1011 = vxor.u32 %v1010, 2147483648
    %v1012 = vmul.f32 %v1011, 1.442695
    %v1013 = vpow.pop %v1012
    %v1014 = vadd.f32 %v1013, 1.0
    %v1015 = vrcp.pop %v1014
    %v1016 = vmul.f32 %v1014, %v1015
    %v1017 = vsub.f32 1.0, %v1016
    %v1018 = vmul.f32 %v1015, %v1017
    %v1019 = vadd.f32 %v1015, %v1018
    %vm1020 = vweird.f32 %v1014
    %vm1021 = vweird.f32 %v1015
    %vm1022 = vmor %vm1020, %vm1021
    %v1023 = vsel %vm1022, %v1015, %v1019
    %v1024 = vand.u32 2147483647, %v1014
    %vm1025 = vcmp.eq.f32.partialorder %v1024, 8.507059e+37
    %v1026 = vand.u32 %v1014, 2147483648
    %v1027 = vor.u32 1.1754944e-38, %v1026
    %v1028 = vsel %vm1025, %v1027, %v1023
    %v1029 = vmul.f32 1.0, %v1028
    %v1030 = vtanh.pop %v1010
    %v1031 = vmul.f32 %v1029, %v977
    %1033 = vrot.lane.b32.xlu0 %v1030, 64
    %v1034 = vpop.permute.xlu0 %1033
    %v1036 = vmul.f32 %v1029, %v1034
    %1038 = vrot.lane.b32.xlu0 %v1036, 32
    %v1039 = vpop.permute.xlu0 %1038
    %v1041 = vadd.f32 %v1031, %v1039
    %v1042 = vtanh.pop %v1041
    %1044 = vrot.lane.b32.xlu0 %v1042, 64
    %v1045 = vpop.permute.xlu0 %1044
    %v1047 = vmul.f32 %v1029, %v1045
    %v1048 = vld [vmem:[#allocation3 + $0xe] sm:$0x3]
    %1050 = vrot.lane.b32.xlu0 %v1047, 32
    %v1051 = vpop.permute.xlu0 %1050
    %v1052 = vsel %vm30, %v1051, 0
    %1054 = vmatpush.msra.mxu0 0.0
    %1055 = vmatpush.msra.mxu0 0.0
    %1056 = vmatpush.msra.mxu0 0.0
    %1057 = vmatpush.msra.mxu0 0.0
    %1058 = vmatpush.msra.mxu0 0.0
    %1059 = vmatpush.msra.mxu0 0.0
    %1060 = vmatpush.msra.mxu0 0.0
    %1061 = vmatpush.msra.mxu0 0.0
    %1062 = vmatpush.msra.mxu0 0.0
    %1063 = vmatpush.msra.mxu0 0.0
    %1064 = vmatpush.msra.mxu0 0.0
    %1065 = vmatpush.msra.mxu0 0.0
    %1066 = vmatpush.msra.mxu0 %v604
    %1067 = vmatpush.msra.mxu0 %v603
    %1068 = vmatpush.msra.mxu0 %v602
    %1069 = vmatpush.msra.mxu0 %v601
    %1070 = vmatmul.f32.gmra.mxu0 %v1052
    %v1071 = vpop.f32.mrf.mxu0
    %v1072 = vadd.f32 0.0, %v1071
    %1073 = vdwg.mxu0
    %v1074 = vadd.f32 %v1048, %v1072
    %v1075 = vxor.u32 %v1074, 2147483648
    %v1076 = vmul.f32 %v1075, 1.442695
    %v1077 = vpow.pop %v1076
    %v1078 = vadd.f32 %v1077, 1.0
    %v1079 = vrcp.pop %v1078
    %v1080 = vmul.f32 %v1078, %v1079
    %v1081 = vsub.f32 1.0, %v1080
    %v1082 = vmul.f32 %v1079, %v1081
    %v1083 = vadd.f32 %v1079, %v1082
    %vm1084 = vweird.f32 %v1078
    %vm1085 = vweird.f32 %v1079
    %vm1086 = vmor %vm1084, %vm1085
    %v1087 = vsel %vm1086, %v1079, %v1083
    %v1088 = vand.u32 2147483647, %v1078
    %vm1089 = vcmp.eq.f32.partialorder %v1088, 8.507059e+37
    %v1090 = vand.u32 %v1078, 2147483648
    %v1091 = vor.u32 1.1754944e-38, %v1090
    %v1092 = vsel %vm1089, %v1091, %v1087
    %v1093 = vmul.f32 1.0, %v1092
    %v1094 = vtanh.pop %v1074
    %v1095 = vmul.f32 %v1093, %v1041
    %1097 = vrot.lane.b32.xlu0 %v1094, 64
    %v1098 = vpop.permute.xlu0 %1097
    %v1100 = vmul.f32 %v1093, %v1098
    %1102 = vrot.lane.b32.xlu0 %v1100, 32
    %v1103 = vpop.permute.xlu0 %1102
    %v1105 = vadd.f32 %v1095, %v1103
    %1107 = vrot.lane.b32.xlu0 %v548, 96
    %v1108 = vpop.permute.xlu0 %1107
    %v1110 = vsel %vm30, %v1108, %v1105
    %vm1111 = vcmask 517120
    %1112 = vst.msk [vmem:[#allocation4] sm:$0x3] %vm1111, %v1110
    // Predicated region
    $region22: #{recurrent_layer_forward.1} parent=1 // pred_check
      _
    $region23: #{recurrent_layer_forward.1} parent=1 // pred_check_branch
      %1114 = sbr.rel (0) target = $region25
    $region24: #{recurrent_layer_forward.1} parent=1 // pred_region
      %1116 = vsyncadd [#allocation5], 0
      %s1118 = sshll.u32 [#allocation4], 4
      %s1119 = int_to_ptr.vmem [resolvable:$true] %s1118
      %s1120 = sshll.u32 %s5, 4
      %s1121 = int_to_ptr.hbm [resolvable:$true] %s1120
      %1123 = dma.vmem_to_hbm [thread:$0]  %s1119, 32, %s1121, [#allocation5]
    $region25: #{recurrent_layer_forward.1} parent=1 // pred_fallthru
      _
    // Predicated region
    $region26: #{recurrent_layer_forward.1} parent=1 // pred_check
      _
    $region27: #{recurrent_layer_forward.1} parent=1 // pred_check_branch
      %1125 = sbr.rel (0) target = $region29
    $region28: #{recurrent_layer_forward.1} parent=1 // pred_region
      %1127 = dma.done [#allocation5], 32
    $region29: #{recurrent_layer_forward.1} parent=1 // pred_fallthru
      _
    %1128 = vsyncpa [#allocation5], 1

</llo_original>
